<compile_context>
chip_gen: v7x
topology: tpu7x:2x2x1
jax: 0.10.0
libtpu: 0.0.40
codegen_flags: <defaults>
</compile_context>

<pallas_src>
import functools

import jax
import jax.numpy as jnp
from jax import lax
from jax.experimental import pallas as pl
from jax.experimental.pallas import tpu as pltpu


# ---------------------------------------------------------------------------
# Fused kernel: spectral post-net + iSTFT, one grid step per batch element.
# ---------------------------------------------------------------------------
def _decoder_kernel(C, T, Fb, n_fft, hop, R, chunk_start, NC,
                    proc_ref, orig_ref, alpha_ref, wm_ref, bm_ref,
                    wmap_ref, bmap_ref, fmask_ref, basis_ref, invenv_ref,
                    out_ref, x_scr, ola_scr):
    TF = T * Fb
    half = C // 2
    f32 = jnp.float32

    x = proc_ref[0]                      # (C, T*F)  lane-dense flat layout
    og = orig_ref[0]                     # (C, T*F)
    alpha = alpha_ref[0]                 # PReLU slope (single shared scalar)

    # ---- PReLU ------------------------------------------------------------
    x = jnp.where(x >= 0.0, x, alpha * x)

    # ---- 1x1 Conv2d (C -> C) + ReLU : one channel-mixing MXU matmul --------
    y = jnp.dot(wm_ref[...], x, preferred_element_type=f32) + bm_ref[...]
    y = jnp.maximum(y, 0.0)

    # ---- complex multiply with the encoder spectrogram ----------------------
    pr, pi = y[:half], y[half:]
    orr, oi = og[:half], og[half:]
    d = jnp.concatenate([pr * orr - pi * oi, pr * oi + pi * orr], axis=0)  # (C, T*F)

    # ---- 3x3 'same' Conv2d (C -> 2): 9 accumulating MXU dots ----------------
    def shifted(v, off):                 # y[:, p] = v[:, p + off], zero fill
        if off == 0:
            return v
        z = jnp.zeros((C, abs(off)), f32)
        if off > 0:
            return jnp.concatenate([v[:, off:], z], axis=1)
        return jnp.concatenate([z, v[:, :TF + off]], axis=1)

    dec = jnp.zeros((2, TF), f32) + bmap_ref[...]        # bias added once
    for k in range(9):
        dt, df = k // 3 - 1, k % 3 - 1
        s = shifted(d, dt * Fb + df)
        if df == -1:                                     # freq-border masks
            s = s * fmask_ref[0:1, :]
        elif df == 1:
            s = s * fmask_ref[1:2, :]
        dec = dec + jnp.dot(wmap_ref[2 * k:2 * k + 2, :], s,
                            preferred_element_type=f32)

    # ---- regroup flat (2, T*F) -> (T, 2*F) for the iSTFT matmul -------------
    # TODO(synk): replace the per-frame store loop with a single lane<->sublane
    #             relayout (reshape/einshape) once guaranteed by Mosaic.
    for t in range(T):
        x_scr[t:t + 1, 0:Fb] = dec[0:1, t * Fb:(t + 1) * Fb]
        x_scr[t:t + 1, Fb:2 * Fb] = dec[1:2, t * Fb:(t + 1) * Fb]

    # ---- iSTFT: windowed irFFT of all frames in ONE MXU matmul --------------
    frames = jnp.dot(x_scr[...], basis_ref[...],
                     preferred_element_type=f32)         # (T, n_fft)

    # ---- vectorized overlap-add: R shifted block adds, no per-frame RMW loop
    ola_scr[...] = jnp.zeros_like(ola_scr)
    for r in range(R):
        ola_scr[r:r + T, :] = ola_scr[r:r + T, :] + frames[:, r * hop:(r + 1) * hop]

    # ---- center crop (as whole hop-chunks) + COLA-envelope normalization ----
    out_ref[0] = ola_scr[chunk_start:chunk_start + NC, :] * invenv_ref[...]


# ---------------------------------------------------------------------------
# Wrapper: layout flattening, weight repacking, DFT-basis / mask / envelope
# precompute, single fused pallas_call.
# ---------------------------------------------------------------------------
def spectral_decoder_forward(proc, orig, params, *, n_fft, hop, length):
    B, C, T, Fb = proc.shape
    f32 = jnp.float32
    TF = T * Fb
    assert n_fft % hop == 0, "hop_length must divide n_fft"
    R = n_fft // hop
    total_len = n_fft + hop * (T - 1)
    crop_start = n_fft // 2                      # torch.istft center=True
    chunk_start = crop_start // hop
    rem = crop_start % hop
    NC = (rem + length + hop - 1) // hop         # emitted hop-chunks
    assert chunk_start + NC <= T + R - 1, "requested length exceeds signal"

    # lane-dense flat layout (free XLA reshapes)
    proc2 = proc.reshape(B, C, TF).astype(f32)
    orig2 = orig.reshape(B, C, TF).astype(f32)

    alpha = params["alpha"].reshape(1).astype(f32)
    wm = params["wm"].astype(f32)                              # (C, C)
    bm2 = params["bm"].reshape(C, 1).astype(f32)
    wmap = params["wmap"].astype(f32)                          # (2, C, 3, 3)
    wmap9 = jnp.transpose(wmap, (2, 3, 0, 1)).reshape(18, C)   # rows [2k,2k+1]
    bmap2 = params["bmap"].reshape(2, 1).astype(f32)
    window = params["window"].astype(f32)

    # frequency-border masks for the +/-1 freq shifts of the flattened slab
    fidx = jnp.arange(TF, dtype=jnp.int32) % Fb
    fmask = jnp.stack([(fidx >= 1).astype(f32),
                       (fidx <= Fb - 2).astype(f32)], axis=0)  # (2, T*F)

    # windowed inverse-rFFT basis: frames = [Xr | Xi] @ [cw ; -sw]
    k = jnp.arange(Fb, dtype=f32)[:, None]
    n = jnp.arange(n_fft, dtype=f32)[None, :]
    ck = jnp.where((k == 0) | (k == n_fft // 2), 1.0, 2.0)
    ang = 2.0 * jnp.pi * k * n / n_fft
    cw = (ck * jnp.cos(ang)) / n_fft * window[None, :]
    sw = (ck * jnp.sin(ang)) / n_fft * window[None, :]
    basis = jnp.concatenate([cw, -sw], axis=0)                 # (2*F, n_fft)

    # squared-window OLA envelope, guarded reciprocal, chunked for the kernel
    env = jnp.zeros((total_len,), f32)
    for t in range(T):
        env = env.at[t * hop:t * hop + n_fft].add(window ** 2)
    invenv = jnp.where(env > 1e-8, 1.0 / env, 0.0)
    invenv_c = invenv[chunk_start * hop:(chunk_start + NC) * hop].reshape(NC, hop)

    smem = pl.BlockSpec(memory_space=pltpu.MemorySpace.SMEM)

    out = pl.pallas_call(
        functools.partial(_decoder_kernel, C, T, Fb, n_fft, hop, R,
                          chunk_start, NC),
        out_shape=jax.ShapeDtypeStruct((B, NC, hop), f32),
        grid=(B,),
        in_specs=[
            pl.BlockSpec((1, C, TF), lambda b: (b, 0, 0)),       # processed
            pl.BlockSpec((1, C, TF), lambda b: (b, 0, 0)),       # original
            smem,                                                # PReLU alpha
            pl.BlockSpec((C, C), lambda b: (0, 0)),              # wm
            pl.BlockSpec((C, 1), lambda b: (0, 0)),              # bm
            pl.BlockSpec((18, C), lambda b: (0, 0)),             # wmap (repacked)
            pl.BlockSpec((2, 1), lambda b: (0, 0)),              # bmap
            pl.BlockSpec((2, TF), lambda b: (0, 0)),             # freq masks
            pl.BlockSpec((2 * Fb, n_fft), lambda b: (0, 0)),     # iFFT basis
            pl.BlockSpec((NC, hop), lambda b: (0, 0)),           # 1/envelope
        ],
        out_specs=pl.BlockSpec((1, NC, hop), lambda b: (b, 0, 0)),
        scratch_shapes=[pltpu.VMEM((T, 2 * Fb), f32),            # [Xr | Xi]
                        pltpu.VMEM((T + R - 1, hop), f32)],      # OLA chunks
        compiler_params=pltpu.CompilerParams(
            dimension_semantics=("parallel",),
            vmem_limit_bytes=32 * 1024 * 1024),
    )(proc2, orig2, alpha, wm, bm2, wmap9, bmap2, fmask, basis, invenv_c)

    return out.reshape(B, NC * hop)[:, rem:rem + length]         # (B, length)


# ---------------------------------------------------------------------------
# Pure-JAX reference (for correctness verification only)
# ---------------------------------------------------------------------------
def reference_forward(proc, orig, params, *, n_fft, hop, length):
    alpha = params["alpha"][0]
    wm, bm = params["wm"], params["bm"]
    wmap, bmap = params["wmap"], params["bmap"]
    window = params["window"]
    B, C, T, Fb = proc.shape
    half = C // 2

    x = jnp.where(proc >= 0.0, proc, alpha * proc)
    y = jnp.einsum("oc,bctf->botf", wm, x) + bm[None, :, None, None]
    y = jnp.maximum(y, 0.0)
    pr, pi = y[:, :half], y[:, half:]
    orr, oi = orig[:, :half], orig[:, half:]
    d = jnp.concatenate([pr * orr - pi * oi, pr * oi + pi * orr], axis=1)
    dec = lax.conv_general_dilated(d, wmap, (1, 1), "SAME",
                                   dimension_numbers=("NCHW", "OIHW", "NCHW"))
    dec = dec + bmap[None, :, None, None]

    spec = dec[:, 0] + 1j * dec[:, 1]                            # (B, T, F)
    frames = jnp.fft.irfft(spec, n=n_fft, axis=-1).astype(jnp.float32)
    frames = frames * window[None, None, :]
    total_len = n_fft + hop * (T - 1)
    y_ola = jnp.zeros((B, total_len), jnp.float32)
    env = jnp.zeros((total_len,), jnp.float32)
    for t in range(T):
        y_ola = y_ola.at[:, t * hop:t * hop + n_fft].add(frames[:, t])
        env = env.at[t * hop:t * hop + n_fft].add(window ** 2)
    s = n_fft // 2
    return y_ola[:, s:s + length] / env[None, s:s + length]


if __name__ == "__main__":
    # small shapes consistent with the module
    B, C, T = 2, 4, 8            # batch, input_channels, STFT frames
    n_fft = 16                   # features (== win_length == hann window size)
    Fb = n_fft // 2 + 1          # onesided freq bins = 9
    hop = 8                      # hop_length
    length = hop * (T - 1)       # target waveform length = 56

    key = jax.random.PRNGKey(0)
    ks = jax.random.split(key, 6)
    proc = jax.random.normal(ks[0], (B, C, T, Fb), jnp.float32)
    orig = jax.random.normal(ks[1], (B, C, T, Fb), jnp.float32)

    n = jnp.arange(n_fft, dtype=jnp.float32)
    window = 0.5 * (1.0 - jnp.cos(2.0 * jnp.pi * n / n_fft))   # torch.hann_window

    params = dict(
        alpha=jnp.full((1,), 0.25, jnp.float32),               # PReLU init
        wm=0.3 * jax.random.normal(ks[2], (C, C), jnp.float32),          # 1x1 conv (O,I)
        bm=0.1 * jax.random.normal(ks[3], (C,), jnp.float32),
        wmap=0.3 * jax.random.normal(ks[4], (2, C, 3, 3), jnp.float32),  # 3x3 conv OIHW
        bmap=0.05 * jax.random.normal(ks[5], (2,), jnp.float32),
        window=window,
    )

    wav = spectral_decoder_forward(proc, orig, params,
                                   n_fft=n_fft, hop=hop, length=length)
    jax.block_until_ready(wav)

    ref = reference_forward(proc, orig, params,
                            n_fft=n_fft, hop=hop, length=length)
    assert wav.shape == (B, length), wav.shape
    err = float(jnp.max(jnp.abs(wav - ref)))
    assert err < 1e-3, f"max abs err {err}"
    print("KERNEL_OK")
</pallas_src>

<mosaic_0001>
module attributes {stable_mosaic.version = 11 : i64} {
  func.func @_decoder_kernel(%arg0: i32, %arg1: memref<1x4x72xf32, #tpu.memory_space<vmem>>, %arg2: memref<1x4x72xf32, #tpu.memory_space<vmem>>, %arg3: memref<1xf32, #tpu.memory_space<smem>>, %arg4: memref<4x4xf32, #tpu.memory_space<vmem>>, %arg5: memref<4x1xf32, #tpu.memory_space<vmem>>, %arg6: memref<18x4xf32, #tpu.memory_space<vmem>>, %arg7: memref<2x1xf32, #tpu.memory_space<vmem>>, %arg8: memref<2x72xf32, #tpu.memory_space<vmem>>, %arg9: memref<18x16xf32, #tpu.memory_space<vmem>>, %arg10: memref<7x8xf32, #tpu.memory_space<vmem>>, %arg11: memref<1x7x8xf32, #tpu.memory_space<vmem>>, %arg12: memref<8x18xf32, #tpu.memory_space<vmem>>, %arg13: memref<9x8xf32, #tpu.memory_space<vmem>>) attributes {dimension_semantics = [#tpu.dimension_semantics<parallel>], iteration_bounds = array<i64: 2>, scalar_prefetch = 0 : i64, scratch_operands = 2 : i64, tpu.core_type = #tpu.core_type<tc>, window_params = [{transform_indices = @transform_0, window_bounds = array<i64: 1, 4, 72>}, {transform_indices = @transform_1, window_bounds = array<i64: 1, 4, 72>}, {transform_indices = @transform_2, window_bounds = array<i64: 1>}, {pipeline_mode = #tpu.pipeline_mode<synchronous>, transform_indices = @transform_3, window_bounds = array<i64: 4, 4>}, {pipeline_mode = #tpu.pipeline_mode<synchronous>, transform_indices = @transform_4, window_bounds = array<i64: 4, 1>}, {pipeline_mode = #tpu.pipeline_mode<synchronous>, transform_indices = @transform_5, window_bounds = array<i64: 18, 4>}, {pipeline_mode = #tpu.pipeline_mode<synchronous>, transform_indices = @transform_6, window_bounds = array<i64: 2, 1>}, {pipeline_mode = #tpu.pipeline_mode<synchronous>, transform_indices = @transform_7, window_bounds = array<i64: 2, 72>}, {pipeline_mode = #tpu.pipeline_mode<synchronous>, transform_indices = @transform_8, window_bounds = array<i64: 18, 16>}, {pipeline_mode = #tpu.pipeline_mode<synchronous>, transform_indices = @transform_9, window_bounds = array<i64: 7, 8>}, {transform_indices = @transform_10, window_bounds = array<i64: 1, 7, 8>}]} {
    %c0 = arith.constant 0 : index
    %c0_0 = arith.constant 0 : index
    %c0_1 = arith.constant 0 : index
    %0 = vector.load %arg1[%c0, %c0_0, %c0_1] : memref<1x4x72xf32, #tpu.memory_space<vmem>>, vector<1x4x72xf32>
    %1 = vector.shape_cast %0 : vector<1x4x72xf32> to vector<4x72xf32>
    %c0_2 = arith.constant 0 : index
    %c0_3 = arith.constant 0 : index
    %c0_4 = arith.constant 0 : index
    %2 = vector.load %arg2[%c0_2, %c0_3, %c0_4] : memref<1x4x72xf32, #tpu.memory_space<vmem>>, vector<1x4x72xf32>
    %3 = vector.shape_cast %2 : vector<1x4x72xf32> to vector<4x72xf32>
    %c0_5 = arith.constant 0 : index
    %4 = memref.load %arg3[%c0_5] : memref<1xf32, #tpu.memory_space<smem>>
    %cst = arith.constant 0.000000e+00 : f32
    %5 = vector.broadcast %cst : f32 to vector<4x72xf32>
    %6 = arith.cmpf oge, %1, %5 : vector<4x72xf32>
    %7 = vector.broadcast %4 : f32 to vector<4x72xf32>
    %8 = arith.mulf %7, %1 : vector<4x72xf32>
    %9 = arith.select %6, %1, %8 : vector<4x72xi1>, vector<4x72xf32>
    %c0_6 = arith.constant 0 : index
    %c0_7 = arith.constant 0 : index
    %10 = vector.load %arg4[%c0_6, %c0_7] : memref<4x4xf32, #tpu.memory_space<vmem>>, vector<4x4xf32>
    %cst_8 = arith.constant dense<0.000000e+00> : vector<4x72xf32>
    %11 = tpu.matmul %10, %9, %cst_8 {dimension_numbers = #tpu.dot_dimension_numbers<[1], [0], [0], [1], [0, 0, 1, 1], [], []>} : vector<4x4xf32>, vector<4x72xf32>, vector<4x72xf32> -> vector<4x72xf32>
    %c0_9 = arith.constant 0 : index
    %c0_10 = arith.constant 0 : index
    %12 = vector.load %arg5[%c0_9, %c0_10] : memref<4x1xf32, #tpu.memory_space<vmem>>, vector<4x1xf32>
    %13 = vector.broadcast %12 : vector<4x1xf32> to vector<4x72xf32>
    %14 = arith.addf %11, %13 : vector<4x72xf32>
    %cst_11 = arith.constant 0.000000e+00 : f32
    %15 = vector.broadcast %cst_11 : f32 to vector<4x72xf32>
    %16 = arith.maximumf %14, %15 : vector<4x72xf32>
    %17 = vector.extract_strided_slice %16 {offsets = [0, 0], sizes = [2, 72], strides = [1, 1]} : vector<4x72xf32> to vector<2x72xf32>
    %18 = vector.extract_strided_slice %16 {offsets = [2, 0], sizes = [2, 72], strides = [1, 1]} : vector<4x72xf32> to vector<2x72xf32>
    %19 = vector.extract_strided_slice %3 {offsets = [0, 0], sizes = [2, 72], strides = [1, 1]} : vector<4x72xf32> to vector<2x72xf32>
    %20 = vector.extract_strided_slice %3 {offsets = [2, 0], sizes = [2, 72], strides = [1, 1]} : vector<4x72xf32> to vector<2x72xf32>
    %21 = arith.mulf %17, %19 : vector<2x72xf32>
    %22 = arith.mulf %18, %20 : vector<2x72xf32>
    %23 = arith.subf %21, %22 : vector<2x72xf32>
    %24 = arith.mulf %17, %20 : vector<2x72xf32>
    %25 = arith.mulf %18, %19 : vector<2x72xf32>
    %26 = arith.addf %24, %25 : vector<2x72xf32>
    %27 = tpu.concatenate %23, %26 in 0 : vector<2x72xf32>, vector<2x72xf32> -> vector<4x72xf32>
    %cst_12 = arith.constant 0.000000e+00 : f32
    %28 = vector.broadcast %cst_12 : f32 to vector<2x72xf32>
    %c0_13 = arith.constant 0 : index
    %c0_14 = arith.constant 0 : index
    %29 = vector.load %arg7[%c0_13, %c0_14] : memref<2x1xf32, #tpu.memory_space<vmem>>, vector<2x1xf32>
    %30 = vector.broadcast %29 : vector<2x1xf32> to vector<2x72xf32>
    %31 = arith.addf %28, %30 : vector<2x72xf32>
    %cst_15 = arith.constant 0.000000e+00 : f32
    %32 = vector.broadcast %cst_15 : f32 to vector<4x10xf32>
    %33 = vector.extract_strided_slice %27 {offsets = [0, 0], sizes = [4, 62], strides = [1, 1]} : vector<4x72xf32> to vector<4x62xf32>
    %34 = tpu.concatenate %32, %33 in 1 : vector<4x10xf32>, vector<4x62xf32> -> vector<4x72xf32>
    %c0_16 = arith.constant 0 : index
    %c0_17 = arith.constant 0 : index
    %35 = vector.load %arg8[%c0_16, %c0_17] : memref<2x72xf32, #tpu.memory_space<vmem>>, vector<1x72xf32>
    %36 = vector.broadcast %35 : vector<1x72xf32> to vector<4x72xf32>
    %37 = arith.mulf %34, %36 : vector<4x72xf32>
    %c0_18 = arith.constant 0 : index
    %c0_19 = arith.constant 0 : index
    %38 = vector.load %arg6[%c0_18, %c0_19] : memref<18x4xf32, #tpu.memory_space<vmem>>, vector<2x4xf32>
    %cst_20 = arith.constant dense<0.000000e+00> : vector<2x72xf32>
    %39 = tpu.matmul %38, %37, %cst_20 {dimension_numbers = #tpu.dot_dimension_numbers<[1], [0], [0], [1], [0, 0, 1, 1], [], []>} : vector<2x4xf32>, vector<4x72xf32>, vector<2x72xf32> -> vector<2x72xf32>
    %40 = arith.addf %31, %39 : vector<2x72xf32>
    %cst_21 = arith.constant 0.000000e+00 : f32
    %41 = vector.broadcast %cst_21 : f32 to vector<4x9xf32>
    %42 = vector.extract_strided_slice %27 {offsets = [0, 0], sizes = [4, 63], strides = [1, 1]} : vector<4x72xf32> to vector<4x63xf32>
    %43 = tpu.concatenate %41, %42 in 1 : vector<4x9xf32>, vector<4x63xf32> -> vector<4x72xf32>
    %c2 = arith.constant 2 : index
    %c0_22 = arith.constant 0 : index
    %44 = vector.load %arg6[%c2, %c0_22] : memref<18x4xf32, #tpu.memory_space<vmem>>, vector<2x4xf32>
    %cst_23 = arith.constant dense<0.000000e+00> : vector<2x72xf32>
    %45 = tpu.matmul %44, %43, %cst_23 {dimension_numbers = #tpu.dot_dimension_numbers<[1], [0], [0], [1], [0, 0, 1, 1], [], []>} : vector<2x4xf32>, vector<4x72xf32>, vector<2x72xf32> -> vector<2x72xf32>
    %46 = arith.addf %40, %45 : vector<2x72xf32>
    %cst_24 = arith.constant 0.000000e+00 : f32
    %47 = vector.broadcast %cst_24 : f32 to vector<4x8xf32>
    %48 = vector.extract_strided_slice %27 {offsets = [0, 0], sizes = [4, 64], strides = [1, 1]} : vector<4x72xf32> to vector<4x64xf32>
    %49 = tpu.concatenate %47, %48 in 1 : vector<4x8xf32>, vector<4x64xf32> -> vector<4x72xf32>
    %c1 = arith.constant 1 : index
    %c0_25 = arith.constant 0 : index
    %50 = vector.load %arg8[%c1, %c0_25] : memref<2x72xf32, #tpu.memory_space<vmem>>, vector<1x72xf32>
    %51 = vector.broadcast %50 : vector<1x72xf32> to vector<4x72xf32>
    %52 = arith.mulf %49, %51 : vector<4x72xf32>
    %c4 = arith.constant 4 : index
    %c0_26 = arith.constant 0 : index
    %53 = vector.load %arg6[%c4, %c0_26] : memref<18x4xf32, #tpu.memory_space<vmem>>, vector<2x4xf32>
    %cst_27 = arith.constant dense<0.000000e+00> : vector<2x72xf32>
    %54 = tpu.matmul %53, %52, %cst_27 {dimension_numbers = #tpu.dot_dimension_numbers<[1], [0], [0], [1], [0, 0, 1, 1], [], []>} : vector<2x4xf32>, vector<4x72xf32>, vector<2x72xf32> -> vector<2x72xf32>
    %55 = arith.addf %46, %54 : vector<2x72xf32>
    %cst_28 = arith.constant 0.000000e+00 : f32
    %56 = vector.broadcast %cst_28 : f32 to vector<4x1xf32>
    %57 = vector.extract_strided_slice %27 {offsets = [0, 0], sizes = [4, 71], strides = [1, 1]} : vector<4x72xf32> to vector<4x71xf32>
    %58 = tpu.concatenate %56, %57 in 1 : vector<4x1xf32>, vector<4x71xf32> -> vector<4x72xf32>
    %c0_29 = arith.constant 0 : index
    %c0_30 = arith.constant 0 : index
    %59 = vector.load %arg8[%c0_29, %c0_30] : memref<2x72xf32, #tpu.memory_space<vmem>>, vector<1x72xf32>
    %60 = vector.broadcast %59 : vector<1x72xf32> to vector<4x72xf32>
    %61 = arith.mulf %58, %60 : vector<4x72xf32>
    %c6 = arith.constant 6 : index
    %c0_31 = arith.constant 0 : index
    %62 = vector.load %arg6[%c6, %c0_31] : memref<18x4xf32, #tpu.memory_space<vmem>>, vector<2x4xf32>
    %cst_32 = arith.constant dense<0.000000e+00> : vector<2x72xf32>
    %63 = tpu.matmul %62, %61, %cst_32 {dimension_numbers = #tpu.dot_dimension_numbers<[1], [0], [0], [1], [0, 0, 1, 1], [], []>} : vector<2x4xf32>, vector<4x72xf32>, vector<2x72xf32> -> vector<2x72xf32>
    %64 = arith.addf %55, %63 : vector<2x72xf32>
    %c8 = arith.constant 8 : index
    %c0_33 = arith.constant 0 : index
    %65 = vector.load %arg6[%c8, %c0_33] : memref<18x4xf32, #tpu.memory_space<vmem>>, vector<2x4xf32>
    %cst_34 = arith.constant dense<0.000000e+00> : vector<2x72xf32>
    %66 = tpu.matmul %65, %27, %cst_34 {dimension_numbers = #tpu.dot_dimension_numbers<[1], [0], [0], [1], [0, 0, 1, 1], [], []>} : vector<2x4xf32>, vector<4x72xf32>, vector<2x72xf32> -> vector<2x72xf32>
    %67 = arith.addf %64, %66 : vector<2x72xf32>
    %cst_35 = arith.constant 0.000000e+00 : f32
    %68 = vector.broadcast %cst_35 : f32 to vector<4x1xf32>
    %69 = vector.extract_strided_slice %27 {offsets = [0, 1], sizes = [4, 71], strides = [1, 1]} : vector<4x72xf32> to vector<4x71xf32>
    %70 = tpu.concatenate %69, %68 in 1 : vector<4x71xf32>, vector<4x1xf32> -> vector<4x72xf32>
    %c1_36 = arith.constant 1 : index
    %c0_37 = arith.constant 0 : index
    %71 = vector.load %arg8[%c1_36, %c0_37] : memref<2x72xf32, #tpu.memory_space<vmem>>, vector<1x72xf32>
    %72 = vector.broadcast %71 : vector<1x72xf32> to vector<4x72xf32>
    %73 = arith.mulf %70, %72 : vector<4x72xf32>
    %c10 = arith.constant 10 : index
    %c0_38 = arith.constant 0 : index
    %74 = vector.load %arg6[%c10, %c0_38] : memref<18x4xf32, #tpu.memory_space<vmem>>, vector<2x4xf32>
    %cst_39 = arith.constant dense<0.000000e+00> : vector<2x72xf32>
    %75 = tpu.matmul %74, %73, %cst_39 {dimension_numbers = #tpu.dot_dimension_numbers<[1], [0], [0], [1], [0, 0, 1, 1], [], []>} : vector<2x4xf32>, vector<4x72xf32>, vector<2x72xf32> -> vector<2x72xf32>
    %76 = arith.addf %67, %75 : vector<2x72xf32>
    %cst_40 = arith.constant 0.000000e+00 : f32
    %77 = vector.broadcast %cst_40 : f32 to vector<4x8xf32>
    %78 = vector.extract_strided_slice %27 {offsets = [0, 8], sizes = [4, 64], strides = [1, 1]} : vector<4x72xf32> to vector<4x64xf32>
    %79 = tpu.concatenate %78, %77 in 1 : vector<4x64xf32>, vector<4x8xf32> -> vector<4x72xf32>
    %c0_41 = arith.constant 0 : index
    %c0_42 = arith.constant 0 : index
    %80 = vector.load %arg8[%c0_41, %c0_42] : memref<2x72xf32, #tpu.memory_space<vmem>>, vector<1x72xf32>
    %81 = vector.broadcast %80 : vector<1x72xf32> to vector<4x72xf32>
    %82 = arith.mulf %79, %81 : vector<4x72xf32>
    %c12 = arith.constant 12 : index
    %c0_43 = arith.constant 0 : index
    %83 = vector.load %arg6[%c12, %c0_43] : memref<18x4xf32, #tpu.memory_space<vmem>>, vector<2x4xf32>
    %cst_44 = arith.constant dense<0.000000e+00> : vector<2x72xf32>
    %84 = tpu.matmul %83, %82, %cst_44 {dimension_numbers = #tpu.dot_dimension_numbers<[1], [0], [0], [1], [0, 0, 1, 1], [], []>} : vector<2x4xf32>, vector<4x72xf32>, vector<2x72xf32> -> vector<2x72xf32>
    %85 = arith.addf %76, %84 : vector<2x72xf32>
    %cst_45 = arith.constant 0.000000e+00 : f32
    %86 = vector.broadcast %cst_45 : f32 to vector<4x9xf32>
    %87 = vector.extract_strided_slice %27 {offsets = [0, 9], sizes = [4, 63], strides = [1, 1]} : vector<4x72xf32> to vector<4x63xf32>
    %88 = tpu.concatenate %87, %86 in 1 : vector<4x63xf32>, vector<4x9xf32> -> vector<4x72xf32>
    %c14 = arith.constant 14 : index
    %c0_46 = arith.constant 0 : index
    %89 = vector.load %arg6[%c14, %c0_46] : memref<18x4xf32, #tpu.memory_space<vmem>>, vector<2x4xf32>
    %cst_47 = arith.constant dense<0.000000e+00> : vector<2x72xf32>
    %90 = tpu.matmul %89, %88, %cst_47 {dimension_numbers = #tpu.dot_dimension_numbers<[1], [0], [0], [1], [0, 0, 1, 1], [], []>} : vector<2x4xf32>, vector<4x72xf32>, vector<2x72xf32> -> vector<2x72xf32>
    %91 = arith.addf %85, %90 : vector<2x72xf32>
    %cst_48 = arith.constant 0.000000e+00 : f32
    %92 = vector.broadcast %cst_48 : f32 to vector<4x10xf32>
    %93 = vector.extract_strided_slice %27 {offsets = [0, 10], sizes = [4, 62], strides = [1, 1]} : vector<4x72xf32> to vector<4x62xf32>
    %94 = tpu.concatenate %93, %92 in 1 : vector<4x62xf32>, vector<4x10xf32> -> vector<4x72xf32>
    %c1_49 = arith.constant 1 : index
    %c0_50 = arith.constant 0 : index
    %95 = vector.load %arg8[%c1_49, %c0_50] : memref<2x72xf32, #tpu.memory_space<vmem>>, vector<1x72xf32>
    %96 = vector.broadcast %95 : vector<1x72xf32> to vector<4x72xf32>
    %97 = arith.mulf %94, %96 : vector<4x72xf32>
    %c16 = arith.constant 16 : index
    %c0_51 = arith.constant 0 : index
    %98 = vector.load %arg6[%c16, %c0_51] : memref<18x4xf32, #tpu.memory_space<vmem>>, vector<2x4xf32>
    %cst_52 = arith.constant dense<0.000000e+00> : vector<2x72xf32>
    %99 = tpu.matmul %98, %97, %cst_52 {dimension_numbers = #tpu.dot_dimension_numbers<[1], [0], [0], [1], [0, 0, 1, 1], [], []>} : vector<2x4xf32>, vector<4x72xf32>, vector<2x72xf32> -> vector<2x72xf32>
    %100 = arith.addf %91, %99 : vector<2x72xf32>
    %101 = vector.extract_strided_slice %100 {offsets = [0, 0], sizes = [1, 9], strides = [1, 1]} : vector<2x72xf32> to vector<1x9xf32>
    %c0_53 = arith.constant 0 : index
    %c0_54 = arith.constant 0 : index
    %102 = vector.load %arg12[%c0_53, %c0_54] : memref<8x18xf32, #tpu.memory_space<vmem>>, vector<1x9xf32>
    tpu.vector_store %arg12[%c0_53, %c0_54], %101 {strides = array<i32>} : memref<8x18xf32, #tpu.memory_space<vmem>>, vector<1x9xf32>,
    %103 = vector.extract_strided_slice %100 {offsets = [1, 0], sizes = [1, 9], strides = [1, 1]} : vector<2x72xf32> to vector<1x9xf32>
    %c0_55 = arith.constant 0 : index
    %c9 = arith.constant 9 : index
    %104 = vector.load %arg12[%c0_55, %c9] : memref<8x18xf32, #tpu.memory_space<vmem>>, vector<1x9xf32>
    tpu.vector_store %arg12[%c0_55, %c9], %103 {strides = array<i32>} : memref<8x18xf32, #tpu.memory_space<vmem>>, vector<1x9xf32>,
    %105 = vector.extract_strided_slice %100 {offsets = [0, 9], sizes = [1, 9], strides = [1, 1]} : vector<2x72xf32> to vector<1x9xf32>
    %c1_56 = arith.constant 1 : index
    %c0_57 = arith.constant 0 : index
    %106 = vector.load %arg12[%c1_56, %c0_57] : memref<8x18xf32, #tpu.memory_space<vmem>>, vector<1x9xf32>
    tpu.vector_store %arg12[%c1_56, %c0_57], %105 {strides = array<i32>} : memref<8x18xf32, #tpu.memory_space<vmem>>, vector<1x9xf32>,
    %107 = vector.extract_strided_slice %100 {offsets = [1, 9], sizes = [1, 9], strides = [1, 1]} : vector<2x72xf32> to vector<1x9xf32>
    %c1_58 = arith.constant 1 : index
    %c9_59 = arith.constant 9 : index
    %108 = vector.load %arg12[%c1_58, %c9_59] : memref<8x18xf32, #tpu.memory_space<vmem>>, vector<1x9xf32>
    tpu.vector_store %arg12[%c1_58, %c9_59], %107 {strides = array<i32>} : memref<8x18xf32, #tpu.memory_space<vmem>>, vector<1x9xf32>,
    %109 = vector.extract_strided_slice %100 {offsets = [0, 18], sizes = [1, 9], strides = [1, 1]} : vector<2x72xf32> to vector<1x9xf32>
    %c2_60 = arith.constant 2 : index
    %c0_61 = arith.constant 0 : index
    %110 = vector.load %arg12[%c2_60, %c0_61] : memref<8x18xf32, #tpu.memory_space<vmem>>, vector<1x9xf32>
    tpu.vector_store %arg12[%c2_60, %c0_61], %109 {strides = array<i32>} : memref<8x18xf32, #tpu.memory_space<vmem>>, vector<1x9xf32>,
    %111 = vector.extract_strided_slice %100 {offsets = [1, 18], sizes = [1, 9], strides = [1, 1]} : vector<2x72xf32> to vector<1x9xf32>
    %c2_62 = arith.constant 2 : index
    %c9_63 = arith.constant 9 : index
    %112 = vector.load %arg12[%c2_62, %c9_63] : memref<8x18xf32, #tpu.memory_space<vmem>>, vector<1x9xf32>
    tpu.vector_store %arg12[%c2_62, %c9_63], %111 {strides = array<i32>} : memref<8x18xf32, #tpu.memory_space<vmem>>, vector<1x9xf32>,
    %113 = vector.extract_strided_slice %100 {offsets = [0, 27], sizes = [1, 9], strides = [1, 1]} : vector<2x72xf32> to vector<1x9xf32>
    %c3 = arith.constant 3 : index
    %c0_64 = arith.constant 0 : index
    %114 = vector.load %arg12[%c3, %c0_64] : memref<8x18xf32, #tpu.memory_space<vmem>>, vector<1x9xf32>
    tpu.vector_store %arg12[%c3, %c0_64], %113 {strides = array<i32>} : memref<8x18xf32, #tpu.memory_space<vmem>>, vector<1x9xf32>,
    %115 = vector.extract_strided_slice %100 {offsets = [1, 27], sizes = [1, 9], strides = [1, 1]} : vector<2x72xf32> to vector<1x9xf32>
    %c3_65 = arith.constant 3 : index
    %c9_66 = arith.constant 9 : index
    %116 = vector.load %arg12[%c3_65, %c9_66] : memref<8x18xf32, #tpu.memory_space<vmem>>, vector<1x9xf32>
    tpu.vector_store %arg12[%c3_65, %c9_66], %115 {strides = array<i32>} : memref<8x18xf32, #tpu.memory_space<vmem>>, vector<1x9xf32>,
    %117 = vector.extract_strided_slice %100 {offsets = [0, 36], sizes = [1, 9], strides = [1, 1]} : vector<2x72xf32> to vector<1x9xf32>
    %c4_67 = arith.constant 4 : index
    %c0_68 = arith.constant 0 : index
    %118 = vector.load %arg12[%c4_67, %c0_68] : memref<8x18xf32, #tpu.memory_space<vmem>>, vector<1x9xf32>
    tpu.vector_store %arg12[%c4_67, %c0_68], %117 {strides = array<i32>} : memref<8x18xf32, #tpu.memory_space<vmem>>, vector<1x9xf32>,
    %119 = vector.extract_strided_slice %100 {offsets = [1, 36], sizes = [1, 9], strides = [1, 1]} : vector<2x72xf32> to vector<1x9xf32>
    %c4_69 = arith.constant 4 : index
    %c9_70 = arith.constant 9 : index
    %120 = vector.load %arg12[%c4_69, %c9_70] : memref<8x18xf32, #tpu.memory_space<vmem>>, vector<1x9xf32>
    tpu.vector_store %arg12[%c4_69, %c9_70], %119 {strides = array<i32>} : memref<8x18xf32, #tpu.memory_space<vmem>>, vector<1x9xf32>,
    %121 = vector.extract_strided_slice %100 {offsets = [0, 45], sizes = [1, 9], strides = [1, 1]} : vector<2x72xf32> to vector<1x9xf32>
    %c5 = arith.constant 5 : index
    %c0_71 = arith.constant 0 : index
    %122 = vector.load %arg12[%c5, %c0_71] : memref<8x18xf32, #tpu.memory_space<vmem>>, vector<1x9xf32>
    tpu.vector_store %arg12[%c5, %c0_71], %121 {strides = array<i32>} : memref<8x18xf32, #tpu.memory_space<vmem>>, vector<1x9xf32>,
    %123 = vector.extract_strided_slice %100 {offsets = [1, 45], sizes = [1, 9], strides = [1, 1]} : vector<2x72xf32> to vector<1x9xf32>
    %c5_72 = arith.constant 5 : index
    %c9_73 = arith.constant 9 : index
    %124 = vector.load %arg12[%c5_72, %c9_73] : memref<8x18xf32, #tpu.memory_space<vmem>>, vector<1x9xf32>
    tpu.vector_store %arg12[%c5_72, %c9_73], %123 {strides = array<i32>} : memref<8x18xf32, #tpu.memory_space<vmem>>, vector<1x9xf32>,
    %125 = vector.extract_strided_slice %100 {offsets = [0, 54], sizes = [1, 9], strides = [1, 1]} : vector<2x72xf32> to vector<1x9xf32>
    %c6_74 = arith.constant 6 : index
    %c0_75 = arith.constant 0 : index
    %126 = vector.load %arg12[%c6_74, %c0_75] : memref<8x18xf32, #tpu.memory_space<vmem>>, vector<1x9xf32>
    tpu.vector_store %arg12[%c6_74, %c0_75], %125 {strides = array<i32>} : memref<8x18xf32, #tpu.memory_space<vmem>>, vector<1x9xf32>,
    %127 = vector.extract_strided_slice %100 {offsets = [1, 54], sizes = [1, 9], strides = [1, 1]} : vector<2x72xf32> to vector<1x9xf32>
    %c6_76 = arith.constant 6 : index
    %c9_77 = arith.constant 9 : index
    %128 = vector.load %arg12[%c6_76, %c9_77] : memref<8x18xf32, #tpu.memory_space<vmem>>, vector<1x9xf32>
    tpu.vector_store %arg12[%c6_76, %c9_77], %127 {strides = array<i32>} : memref<8x18xf32, #tpu.memory_space<vmem>>, vector<1x9xf32>,
    %129 = vector.extract_strided_slice %100 {offsets = [0, 63], sizes = [1, 9], strides = [1, 1]} : vector<2x72xf32> to vector<1x9xf32>
    %c7 = arith.constant 7 : index
    %c0_78 = arith.constant 0 : index
    %130 = vector.load %arg12[%c7, %c0_78] : memref<8x18xf32, #tpu.memory_space<vmem>>, vector<1x9xf32>
    tpu.vector_store %arg12[%c7, %c0_78], %129 {strides = array<i32>} : memref<8x18xf32, #tpu.memory_space<vmem>>, vector<1x9xf32>,
    %131 = vector.extract_strided_slice %100 {offsets = [1, 63], sizes = [1, 9], strides = [1, 1]} : vector<2x72xf32> to vector<1x9xf32>
    %c7_79 = arith.constant 7 : index
    %c9_80 = arith.constant 9 : index
    %132 = vector.load %arg12[%c7_79, %c9_80] : memref<8x18xf32, #tpu.memory_space<vmem>>, vector<1x9xf32>
    tpu.vector_store %arg12[%c7_79, %c9_80], %131 {strides = array<i32>} : memref<8x18xf32, #tpu.memory_space<vmem>>, vector<1x9xf32>,
    %c0_81 = arith.constant 0 : index
    %c0_82 = arith.constant 0 : index
    %133 = vector.load %arg12[%c0_81, %c0_82] : memref<8x18xf32, #tpu.memory_space<vmem>>, vector<8x18xf32>
    %c0_83 = arith.constant 0 : index
    %c0_84 = arith.constant 0 : index
    %134 = vector.load %arg9[%c0_83, %c0_84] : memref<18x16xf32, #tpu.memory_space<vmem>>, vector<18x16xf32>
    %cst_85 = arith.constant dense<0.000000e+00> : vector<8x16xf32>
    %135 = tpu.matmul %133, %134, %cst_85 {dimension_numbers = #tpu.dot_dimension_numbers<[1], [0], [0], [1], [0, 0, 1, 1], [], []>} : vector<8x18xf32>, vector<18x16xf32>, vector<8x16xf32> -> vector<8x16xf32>
    %cst_86 = arith.constant 0.000000e+00 : f32
    %136 = vector.broadcast %cst_86 : f32 to vector<9x8xf32>
    %c0_87 = arith.constant 0 : index
    %c0_88 = arith.constant 0 : index
    %137 = vector.load %arg13[%c0_87, %c0_88] : memref<9x8xf32, #tpu.memory_space<vmem>>, vector<9x8xf32>
    tpu.vector_store %arg13[%c0_87, %c0_88], %136 {strides = array<i32>} : memref<9x8xf32, #tpu.memory_space<vmem>>, vector<9x8xf32>,
    %c0_89 = arith.constant 0 : index
    %c0_90 = arith.constant 0 : index
    %138 = vector.load %arg13[%c0_89, %c0_90] : memref<9x8xf32, #tpu.memory_space<vmem>>, vector<8x8xf32>
    %139 = vector.extract_strided_slice %135 {offsets = [0, 0], sizes = [8, 8], strides = [1, 1]} : vector<8x16xf32> to vector<8x8xf32>
    %140 = arith.addf %138, %139 : vector<8x8xf32>
    %c0_91 = arith.constant 0 : index
    %c0_92 = arith.constant 0 : index
    %141 = vector.load %arg13[%c0_91, %c0_92] : memref<9x8xf32, #tpu.memory_space<vmem>>, vector<8x8xf32>
    tpu.vector_store %arg13[%c0_91, %c0_92], %140 {strides = array<i32>} : memref<9x8xf32, #tpu.memory_space<vmem>>, vector<8x8xf32>,
    %c1_93 = arith.constant 1 : index
    %c0_94 = arith.constant 0 : index
    %142 = vector.load %arg13[%c1_93, %c0_94] : memref<9x8xf32, #tpu.memory_space<vmem>>, vector<8x8xf32>
    %143 = vector.extract_strided_slice %135 {offsets = [0, 8], sizes = [8, 8], strides = [1, 1]} : vector<8x16xf32> to vector<8x8xf32>
    %144 = arith.addf %142, %143 : vector<8x8xf32>
    %c1_95 = arith.constant 1 : index
    %c0_96 = arith.constant 0 : index
    %145 = vector.load %arg13[%c1_95, %c0_96] : memref<9x8xf32, #tpu.memory_space<vmem>>, vector<8x8xf32>
    tpu.vector_store %arg13[%c1_95, %c0_96], %144 {strides = array<i32>} : memref<9x8xf32, #tpu.memory_space<vmem>>, vector<8x8xf32>,
    %c1_97 = arith.constant 1 : index
    %c0_98 = arith.constant 0 : index
    %146 = vector.load %arg13[%c1_97, %c0_98] : memref<9x8xf32, #tpu.memory_space<vmem>>, vector<7x8xf32>
    %c0_99 = arith.constant 0 : index
    %c0_100 = arith.constant 0 : index
    %147 = vector.load %arg10[%c0_99, %c0_100] : memref<7x8xf32, #tpu.memory_space<vmem>>, vector<7x8xf32>
    %148 = arith.mulf %146, %147 : vector<7x8xf32>
    %c0_101 = arith.constant 0 : index
    %c0_102 = arith.constant 0 : index
    %c0_103 = arith.constant 0 : index
    %149 = vector.load %arg11[%c0_101, %c0_102, %c0_103] : memref<1x7x8xf32, #tpu.memory_space<vmem>>, vector<1x7x8xf32>
    %150 = vector.shape_cast %149 : vector<1x7x8xf32> to vector<7x8xf32>
    %151 = vector.shape_cast %148 : vector<7x8xf32> to vector<1x7x8xf32>
    tpu.vector_store %arg11[%c0_101, %c0_102, %c0_103], %151 {strides = array<i32>} : memref<1x7x8xf32, #tpu.memory_space<vmem>>, vector<1x7x8xf32>,
    return
  }
  func.func @transform_0(%arg0: i32) -> (i32, i32, i32) {
    %c0_i32 = arith.constant 0 : i32
    %c0_i32_0 = arith.constant 0 : i32
    %c0_i32_1 = arith.constant 0 : i32
    return %arg0, %c0_i32, %c0_i32_0 : i32, i32, i32
  }
  func.func @transform_1(%arg0: i32) -> (i32, i32, i32) {
    %c0_i32 = arith.constant 0 : i32
    %c0_i32_0 = arith.constant 0 : i32
    %c0_i32_1 = arith.constant 0 : i32
    return %arg0, %c0_i32, %c0_i32_0 : i32, i32, i32
  }
  func.func @transform_2(%arg0: i32) -> i32 {
    %c0_i32 = arith.constant 0 : i32
    %c0_i32_0 = arith.constant 0 : i32
    return %c0_i32 : i32
  }
  func.func @transform_3(%arg0: i32) -> (i32, i32) {
    %c0_i32 = arith.constant 0 : i32
    %c0_i32_0 = arith.constant 0 : i32
    %c0_i32_1 = arith.constant 0 : i32
    return %c0_i32, %c0_i32_0 : i32, i32
  }
  func.func @transform_4(%arg0: i32) -> (i32, i32) {
    %c0_i32 = arith.constant 0 : i32
    %c0_i32_0 = arith.constant 0 : i32
    %c0_i32_1 = arith.constant 0 : i32
    return %c0_i32, %c0_i32_0 : i32, i32
  }
  func.func @transform_5(%arg0: i32) -> (i32, i32) {
    %c0_i32 = arith.constant 0 : i32
    %c0_i32_0 = arith.constant 0 : i32
    %c0_i32_1 = arith.constant 0 : i32
    return %c0_i32, %c0_i32_0 : i32, i32
  }
  func.func @transform_6(%arg0: i32) -> (i32, i32) {
    %c0_i32 = arith.constant 0 : i32
    %c0_i32_0 = arith.constant 0 : i32
    %c0_i32_1 = arith.constant 0 : i32
    return %c0_i32, %c0_i32_0 : i32, i32
  }
  func.func @transform_7(%arg0: i32) -> (i32, i32) {
    %c0_i32 = arith.constant 0 : i32
    %c0_i32_0 = arith.constant 0 : i32
    %c0_i32_1 = arith.constant 0 : i32
    return %c0_i32, %c0_i32_0 : i32, i32
  }
  func.func @transform_8(%arg0: i32) -> (i32, i32) {
    %c0_i32 = arith.constant 0 : i32
    %c0_i32_0 = arith.constant 0 : i32
    %c0_i32_1 = arith.constant 0 : i32
    return %c0_i32, %c0_i32_0 : i32, i32
  }
  func.func @transform_9(%arg0: i32) -> (i32, i32) {
    %c0_i32 = arith.constant 0 : i32
    %c0_i32_0 = arith.constant 0 : i32
    %c0_i32_1 = arith.constant 0 : i32
    return %c0_i32, %c0_i32_0 : i32, i32
  }
  func.func @transform_10(%arg0: i32) -> (i32, i32, i32) {
    %c0_i32 = arith.constant 0 : i32
    %c0_i32_0 = arith.constant 0 : i32
    %c0_i32_1 = arith.constant 0 : i32
    return %arg0, %c0_i32, %c0_i32_0 : i32, i32, i32
  }
}

</mosaic_0001>

<llo_original>
// kernel: tpu_custom_call.1
$region0: #{tpu_custom_call.1}
  #allocation0 [shape = 'u32[]', space=smem, size = 0x4, offset = 0x4, fixed_abs, tag = 'smem constant byte address 0x4 - core index']
  #allocation1 [shape = 'u32[144,128]{1,0:T(1,128)}', space=vmem, size = 0x12000, scoped, tag = 'internal scratch']
  #allocation2 [shape = 'f32[8,18]{1,0:T(8,128)}', space=vmem, size = 0x1000, scoped, tag = 'scratch operand']
  #allocation3 [shape = 'f32[9,8]{1,0:T(8,128)}', space=vmem, size = 0x2000, scoped, tag = 'scratch operand']
  #allocation4 [shape = 'f32[1]{0:T(128)S(6)}', space=smem, size = 0x200, scoped, tag = 'scoped memory for tpu_custom_call.1']
  %s0 = inlined_call_operand.vmem [shape: f32[2,4,72], index: 0, kind: input, shape index: {}]
  %s1 = inlined_call_operand.vmem [shape: f32[2,4,72], index: 1, kind: input, shape index: {}]
  %s2 = inlined_call_operand.<no memory space> [shape: f32[1], index: 2, kind: input, shape index: {}]
  %s3 = inlined_call_operand.vmem [shape: f32[4,4], index: 3, kind: input, shape index: {}]
  %s4 = inlined_call_operand.vmem [shape: f32[4,1], index: 4, kind: input, shape index: {}]
  %s5 = inlined_call_operand.vmem [shape: f32[18,4], index: 5, kind: input, shape index: {}]
  %s6 = inlined_call_operand.vmem [shape: f32[2,1], index: 6, kind: input, shape index: {}]
  %s7 = inlined_call_operand.vmem [shape: f32[2,72], index: 7, kind: input, shape index: {}]
  %s8 = inlined_call_operand.vmem [shape: f32[18,16], index: 8, kind: input, shape index: {}]
  %s9 = inlined_call_operand.vmem [shape: f32[7,8], index: 9, kind: input, shape index: {}]
  %s10 = inlined_call_operand.vmem [shape: f32[2,7,8], index: 10, kind: output, shape index: {}]
  %s11 = sld [smem:[#allocation0]]
  $region73: #{tpu_custom_call.1} parent=0
    _
  %s13 = ssub.s32 1, %s11
  %s14 = scalar_select 0, %s13, %s11
  %15 = sst [smem:[#allocation4]] %s2
  loop: start=0, step=1, limit=4
  $region2: #{tpu_custom_call.1} parent=0 // loop_pre_header
    _
  $region3: #{tpu_custom_call.1} parent=0 // loop_header
    %s17 = sphi 0, %s21
    %p18 = scmp.ge.s32.totalorder %s17, 4
    %s27 = sphi 0, %s29
    %s30 = sphi 0, %s27
    %s31 = sphi 0, %s30
    %s47 = sphi 0, %s31
    %s53 = sphi 0, %s55
    %s56 = sphi 0, %s53
    %s57 = sphi 0, %s56
    %s73 = sphi 0, %s57
    %s77 = sphi 0, %s77
    %s79 = sphi 0, %s77
    %s80 = sphi 0, %s79
    %s94 = sphi 0, %s80
    %s98 = sphi 0, %s98
    %s100 = sphi 0, %s98
    %s101 = sphi 0, %s100
    %s115 = sphi 0, %s101
    %s119 = sphi 0, %s119
    %s121 = sphi 0, %s119
    %s122 = sphi 0, %s121
    %s136 = sphi 0, %s122
    %s140 = sphi 0, %s140
    %s142 = sphi 0, %s140
    %s143 = sphi 0, %s142
    %s157 = sphi 0, %s143
    %s161 = sphi 0, %s161
    %s163 = sphi 0, %s161
    %s164 = sphi 0, %s163
    %s178 = sphi 0, %s164
    %s182 = sphi 0, %s182
    %s184 = sphi 0, %s182
    %s185 = sphi 0, %s184
    %s199 = sphi 0, %s185
    %s203 = sphi 0, %s203
    %s205 = sphi 0, %s203
    %s206 = sphi 0, %s205
    %s220 = sphi 0, %s206
    %s224 = sphi 0, %s224
    %s226 = sphi 0, %s224
    %s227 = sphi 0, %s226
    %s241 = sphi 0, %s227
    %s247 = sphi 0, %s249
    %s250 = sphi 0, %s247
    %s251 = sphi 0, %s250
    %s267 = sphi 0, %s251
  $region4: #{tpu_custom_call.1} parent=0 // loop_header_branch
    %20 = sbr.rel (%p18) target = $region8
  $region5: #{tpu_custom_call.1} parent=0 // loop_body
    %s22 = ssub.s32 %s17, 1
    %s23 = ssub.s32 %s17, 2
    %s24 = sadd.s32 %s17, 1
    %s25 = ssub.s32 %s17, %s24
    %p26 = scmp.eq.s32.totalorder %s25, 0
    %s28 = sadd.s32 %s27, 1
    %s29 = scalar_select %p26, %s27, %s28
    %p32 = pneg %p26
    %p33 = scmp.eq.s32.totalorder %s17, 1
    %p34 = por %p32, %p33
    %p35 = scmp.ne.s32.totalorder %s27, %s30
    %p36 = scmp.eq.s32.totalorder %s17, 0
    %p37 = por %p35, %p36
    %p38 = scmp.ne.s32.totalorder %s27, %s30
    %p39 = scmp.eq.s32.totalorder %s22, 1
    %p40 = por %p38, %p39
    %p41 = scmp.ne.s32.totalorder %s30, %s31
    %p42 = scmp.eq.s32.totalorder %s22, 0
    %p43 = por %p41, %p42
    %p44 = scmp.ne.s32.totalorder %s30, %s31
    %p45 = scmp.eq.s32.totalorder %s23, 1
    %p46 = por %p44, %p45
    %p48 = scmp.ne.s32.totalorder %s31, %s47
    %p49 = scmp.eq.s32.totalorder %s23, 0
    %p50 = por %p48, %p49
    %s51 = ssub.s32 %s17, %s24
    %p52 = scmp.eq.s32.totalorder %s51, 0
    %s54 = sadd.s32 %s53, 1
    %s55 = scalar_select %p52, %s53, %s54
    %p58 = pneg %p52
    %p59 = scmp.eq.s32.totalorder %s17, 1
    %p60 = por %p58, %p59
    %p61 = scmp.ne.s32.totalorder %s53, %s56
    %p62 = scmp.eq.s32.totalorder %s17, 0
    %p63 = por %p61, %p62
    %p64 = scmp.ne.s32.totalorder %s53, %s56
    %p65 = scmp.eq.s32.totalorder %s22, 1
    %p66 = por %p64, %p65
    %p67 = scmp.ne.s32.totalorder %s56, %s57
    %p68 = scmp.eq.s32.totalorder %s22, 0
    %p69 = por %p67, %p68
    %p70 = scmp.ne.s32.totalorder %s56, %s57
    %p71 = scmp.eq.s32.totalorder %s23, 1
    %p72 = por %p70, %p71
    %p74 = scmp.ne.s32.totalorder %s57, %s73
    %p75 = scmp.eq.s32.totalorder %s23, 0
    %p76 = por %p74, %p75
    %s78 = sadd.s32 %s77, 1
    %p81 = scmp.eq.s32.totalorder %s17, 1
    %p82 = scmp.ne.s32.totalorder %s77, %s79
    %p83 = scmp.eq.s32.totalorder %s17, 0
    %p84 = por %p82, %p83
    %p85 = scmp.ne.s32.totalorder %s77, %s79
    %p86 = scmp.eq.s32.totalorder %s22, 1
    %p87 = por %p85, %p86
    %p88 = scmp.ne.s32.totalorder %s79, %s80
    %p89 = scmp.eq.s32.totalorder %s22, 0
    %p90 = por %p88, %p89
    %p91 = scmp.ne.s32.totalorder %s79, %s80
    %p92 = scmp.eq.s32.totalorder %s23, 1
    %p93 = por %p91, %p92
    %p95 = scmp.ne.s32.totalorder %s80, %s94
    %p96 = scmp.eq.s32.totalorder %s23, 0
    %p97 = por %p95, %p96
    %s99 = sadd.s32 %s98, 1
    %p102 = scmp.eq.s32.totalorder %s17, 1
    %p103 = scmp.ne.s32.totalorder %s98, %s100
    %p104 = scmp.eq.s32.totalorder %s17, 0
    %p105 = por %p103, %p104
    %p106 = scmp.ne.s32.totalorder %s98, %s100
    %p107 = scmp.eq.s32.totalorder %s22, 1
    %p108 = por %p106, %p107
    %p109 = scmp.ne.s32.totalorder %s100, %s101
    %p110 = scmp.eq.s32.totalorder %s22, 0
    %p111 = por %p109, %p110
    %p112 = scmp.ne.s32.totalorder %s100, %s101
    %p113 = scmp.eq.s32.totalorder %s23, 1
    %p114 = por %p112, %p113
    %p116 = scmp.ne.s32.totalorder %s101, %s115
    %p117 = scmp.eq.s32.totalorder %s23, 0
    %p118 = por %p116, %p117
    %s120 = sadd.s32 %s119, 1
    %p123 = scmp.eq.s32.totalorder %s17, 1
    %p124 = scmp.ne.s32.totalorder %s119, %s121
    %p125 = scmp.eq.s32.totalorder %s17, 0
    %p126 = por %p124, %p125
    %p127 = scmp.ne.s32.totalorder %s119, %s121
    %p128 = scmp.eq.s32.totalorder %s22, 1
    %p129 = por %p127, %p128
    %p130 = scmp.ne.s32.totalorder %s121, %s122
    %p131 = scmp.eq.s32.totalorder %s22, 0
    %p132 = por %p130, %p131
    %p133 = scmp.ne.s32.totalorder %s121, %s122
    %p134 = scmp.eq.s32.totalorder %s23, 1
    %p135 = por %p133, %p134
    %p137 = scmp.ne.s32.totalorder %s122, %s136
    %p138 = scmp.eq.s32.totalorder %s23, 0
    %p139 = por %p137, %p138
    %s141 = sadd.s32 %s140, 1
    %p144 = scmp.eq.s32.totalorder %s17, 1
    %p145 = scmp.ne.s32.totalorder %s140, %s142
    %p146 = scmp.eq.s32.totalorder %s17, 0
    %p147 = por %p145, %p146
    %p148 = scmp.ne.s32.totalorder %s140, %s142
    %p149 = scmp.eq.s32.totalorder %s22, 1
    %p150 = por %p148, %p149
    %p151 = scmp.ne.s32.totalorder %s142, %s143
    %p152 = scmp.eq.s32.totalorder %s22, 0
    %p153 = por %p151, %p152
    %p154 = scmp.ne.s32.totalorder %s142, %s143
    %p155 = scmp.eq.s32.totalorder %s23, 1
    %p156 = por %p154, %p155
    %p158 = scmp.ne.s32.totalorder %s143, %s157
    %p159 = scmp.eq.s32.totalorder %s23, 0
    %p160 = por %p158, %p159
    %s162 = sadd.s32 %s161, 1
    %p165 = scmp.eq.s32.totalorder %s17, 1
    %p166 = scmp.ne.s32.totalorder %s161, %s163
    %p167 = scmp.eq.s32.totalorder %s17, 0
    %p168 = por %p166, %p167
    %p169 = scmp.ne.s32.totalorder %s161, %s163
    %p170 = scmp.eq.s32.totalorder %s22, 1
    %p171 = por %p169, %p170
    %p172 = scmp.ne.s32.totalorder %s163, %s164
    %p173 = scmp.eq.s32.totalorder %s22, 0
    %p174 = por %p172, %p173
    %p175 = scmp.ne.s32.totalorder %s163, %s164
    %p176 = scmp.eq.s32.totalorder %s23, 1
    %p177 = por %p175, %p176
    %p179 = scmp.ne.s32.totalorder %s164, %s178
    %p180 = scmp.eq.s32.totalorder %s23, 0
    %p181 = por %p179, %p180
    %s183 = sadd.s32 %s182, 1
    %p186 = scmp.eq.s32.totalorder %s17, 1
    %p187 = scmp.ne.s32.totalorder %s182, %s184
    %p188 = scmp.eq.s32.totalorder %s17, 0
    %p189 = por %p187, %p188
    %p190 = scmp.ne.s32.totalorder %s182, %s184
    %p191 = scmp.eq.s32.totalorder %s22, 1
    %p192 = por %p190, %p191
    %p193 = scmp.ne.s32.totalorder %s184, %s185
    %p194 = scmp.eq.s32.totalorder %s22, 0
    %p195 = por %p193, %p194
    %p196 = scmp.ne.s32.totalorder %s184, %s185
    %p197 = scmp.eq.s32.totalorder %s23, 1
    %p198 = por %p196, %p197
    %p200 = scmp.ne.s32.totalorder %s185, %s199
    %p201 = scmp.eq.s32.totalorder %s23, 0
    %p202 = por %p200, %p201
    %s204 = sadd.s32 %s203, 1
    %p207 = scmp.eq.s32.totalorder %s17, 1
    %p208 = scmp.ne.s32.totalorder %s203, %s205
    %p209 = scmp.eq.s32.totalorder %s17, 0
    %p210 = por %p208, %p209
    %p211 = scmp.ne.s32.totalorder %s203, %s205
    %p212 = scmp.eq.s32.totalorder %s22, 1
    %p213 = por %p211, %p212
    %p214 = scmp.ne.s32.totalorder %s205, %s206
    %p215 = scmp.eq.s32.totalorder %s22, 0
    %p216 = por %p214, %p215
    %p217 = scmp.ne.s32.totalorder %s205, %s206
    %p218 = scmp.eq.s32.totalorder %s23, 1
    %p219 = por %p217, %p218
    %p221 = scmp.ne.s32.totalorder %s206, %s220
    %p222 = scmp.eq.s32.totalorder %s23, 0
    %p223 = por %p221, %p222
    %s225 = sadd.s32 %s224, 1
    %p228 = scmp.eq.s32.totalorder %s17, 1
    %p229 = scmp.ne.s32.totalorder %s224, %s226
    %p230 = scmp.eq.s32.totalorder %s17, 0
    %p231 = por %p229, %p230
    %p232 = scmp.ne.s32.totalorder %s224, %s226
    %p233 = scmp.eq.s32.totalorder %s22, 1
    %p234 = por %p232, %p233
    %p235 = scmp.ne.s32.totalorder %s226, %s227
    %p236 = scmp.eq.s32.totalorder %s22, 0
    %p237 = por %p235, %p236
    %p238 = scmp.ne.s32.totalorder %s226, %s227
    %p239 = scmp.eq.s32.totalorder %s23, 1
    %p240 = por %p238, %p239
    %p242 = scmp.ne.s32.totalorder %s227, %s241
    %p243 = scmp.eq.s32.totalorder %s23, 0
    %p244 = por %p242, %p243
    %s245 = ssub.s32 %s17, %s24
    %p246 = scmp.eq.s32.totalorder %s245, 0
    %s248 = sadd.s32 %s247, 1
    %s249 = scalar_select %p246, %s247, %s248
    %p252 = pneg %p246
    %p253 = scmp.eq.s32.totalorder %s17, 1
    %p254 = por %p252, %p253
    %p255 = scmp.ne.s32.totalorder %s247, %s250
    %p256 = scmp.eq.s32.totalorder %s17, 0
    %p257 = por %p255, %p256
    %p258 = scmp.ne.s32.totalorder %s247, %s250
    %p259 = scmp.eq.s32.totalorder %s22, 1
    %p260 = por %p258, %p259
    %p261 = scmp.ne.s32.totalorder %s250, %s251
    %p262 = scmp.eq.s32.totalorder %s22, 0
    %p263 = por %p261, %p262
    %p264 = scmp.ne.s32.totalorder %s250, %s251
    %p265 = scmp.eq.s32.totalorder %s23, 1
    %p266 = por %p264, %p265
    %p268 = scmp.ne.s32.totalorder %s251, %s267
    %p269 = scmp.eq.s32.totalorder %s23, 0
    %p270 = por %p268, %p269
    %p271 = scmp.le.s32.totalorder 1, %s17
    %p272 = scmp.lt.s32.totalorder %s17, 3
    %p273 = pnand %p271, %p272
    %p274 = pneg %p273
    // Predicated region
    $region9: #{tpu_custom_call.1} parent=5 // pred_check
      _
    $region10: #{tpu_custom_call.1} parent=5 // pred_check_branch
      %276 = sbr.rel (%p273) target = $region12
    $region11: #{tpu_custom_call.1} parent=5 // pred_region
      %s277 = ssub.s32 %s17, 1
      // Predicated region
      $region13: #{tpu_custom_call.1} parent=11 // pred_check
        %p278 = pneg %p90
      $region14: #{tpu_custom_call.1} parent=11 // pred_check_branch
        %280 = sbr.rel (%p278) target = $region16
      $region15: #{tpu_custom_call.1} parent=11 // pred_region
        _
      $region16: #{tpu_custom_call.1} parent=11 // pred_fallthru
        _
      // Predicated region
      $region17: #{tpu_custom_call.1} parent=11 // pred_check
        %p281 = pneg %p111
      $region18: #{tpu_custom_call.1} parent=11 // pred_check_branch
        %283 = sbr.rel (%p281) target = $region20
      $region19: #{tpu_custom_call.1} parent=11 // pred_region
        _
      $region20: #{tpu_custom_call.1} parent=11 // pred_fallthru
        _
      // Predicated region
      $region21: #{tpu_custom_call.1} parent=11 // pred_check
        %p284 = pneg %p132
      $region22: #{tpu_custom_call.1} parent=11 // pred_check_branch
        %286 = sbr.rel (%p284) target = $region24
      $region23: #{tpu_custom_call.1} parent=11 // pred_region
        _
      $region24: #{tpu_custom_call.1} parent=11 // pred_fallthru
        _
      // Predicated region
      $region25: #{tpu_custom_call.1} parent=11 // pred_check
        %p287 = pneg %p153
      $region26: #{tpu_custom_call.1} parent=11 // pred_check_branch
        %289 = sbr.rel (%p287) target = $region28
      $region27: #{tpu_custom_call.1} parent=11 // pred_region
        _
      $region28: #{tpu_custom_call.1} parent=11 // pred_fallthru
        _
      // Predicated region
      $region29: #{tpu_custom_call.1} parent=11 // pred_check
        %p290 = pneg %p174
      $region30: #{tpu_custom_call.1} parent=11 // pred_check_branch
        %292 = sbr.rel (%p290) target = $region32
      $region31: #{tpu_custom_call.1} parent=11 // pred_region
        _
      $region32: #{tpu_custom_call.1} parent=11 // pred_fallthru
        _
      // Predicated region
      $region33: #{tpu_custom_call.1} parent=11 // pred_check
        %p293 = pneg %p195
      $region34: #{tpu_custom_call.1} parent=11 // pred_check_branch
        %295 = sbr.rel (%p293) target = $region36
      $region35: #{tpu_custom_call.1} parent=11 // pred_region
        _
      $region36: #{tpu_custom_call.1} parent=11 // pred_fallthru
        _
      // Predicated region
      $region37: #{tpu_custom_call.1} parent=11 // pred_check
        %p296 = pneg %p216
      $region38: #{tpu_custom_call.1} parent=11 // pred_check_branch
        %298 = sbr.rel (%p296) target = $region40
      $region39: #{tpu_custom_call.1} parent=11 // pred_region
        _
      $region40: #{tpu_custom_call.1} parent=11 // pred_fallthru
        _
      // Predicated region
      $region41: #{tpu_custom_call.1} parent=11 // pred_check
        %p299 = pneg %p237
      $region42: #{tpu_custom_call.1} parent=11 // pred_check_branch
        %301 = sbr.rel (%p299) target = $region44
      $region43: #{tpu_custom_call.1} parent=11 // pred_region
        _
      $region44: #{tpu_custom_call.1} parent=11 // pred_fallthru
        _
    $region12: #{tpu_custom_call.1} parent=5 // pred_fallthru
      _
    %p302 = scmp.lt.s32.totalorder %s17, 2
    // Predicated region
    $region45: #{tpu_custom_call.1} parent=5 // pred_check
      %p303 = pneg %p302
    $region46: #{tpu_custom_call.1} parent=5 // pred_check_branch
      %305 = sbr.rel (%p303) target = $region48
    $region47: #{tpu_custom_call.1} parent=5 // pred_region
      // Predicated region
      $region49: #{tpu_custom_call.1} parent=47 // pred_check
        %p306 = pneg %p37
      $region50: #{tpu_custom_call.1} parent=47 // pred_check_branch
        %308 = sbr.rel (%p306) target = $region52
      $region51: #{tpu_custom_call.1} parent=47 // pred_region
        %p309 = scmp.lt.s32.totalorder %s17, 1
        %s310 = scalar_select %p309, %s17, 1
        %s311 = smul.addr %s310, 4
        %s312 = scalar_lea.vmem %s0, %s311
      $region52: #{tpu_custom_call.1} parent=47 // pred_fallthru
        _
      // Predicated region
      $region53: #{tpu_custom_call.1} parent=47 // pred_check
        %p313 = pneg %p63
      $region54: #{tpu_custom_call.1} parent=47 // pred_check_branch
        %315 = sbr.rel (%p313) target = $region56
      $region55: #{tpu_custom_call.1} parent=47 // pred_region
        %p316 = scmp.lt.s32.totalorder %s17, 1
        %s317 = scalar_select %p316, %s17, 1
        %s318 = smul.addr %s317, 4
        %s319 = scalar_lea.vmem %s1, %s318
      $region56: #{tpu_custom_call.1} parent=47 // pred_fallthru
        _
    $region48: #{tpu_custom_call.1} parent=5 // pred_fallthru
      _
    %p320 = scmp.le.s32.totalorder 1, %s17
    %p321 = scmp.lt.s32.totalorder %s17, 3
    %p322 = pnand %p320, %p321
    %p323 = pneg %p322
    // Predicated region
    $region57: #{tpu_custom_call.1} parent=5 // pred_check
      _
    $region58: #{tpu_custom_call.1} parent=5 // pred_check_branch
      %325 = sbr.rel (%p322) target = $region60
    $region59: #{tpu_custom_call.1} parent=5 // pred_region
      %s326 = ssub.s32 %s17, 1
      %p327 = scmp.lt.s32.totalorder %s22, 1
      %s328 = scalar_select %p327, %s22, 1
      %s329 = smul.addr %s328, 4
      %s330 = scalar_lea.vmem %s0, %s329
      %p331 = pneg %p43
      %p332 = pneg %p40
      %p333 = scmp.lt.s32.totalorder %s22, 1
      %s334 = scalar_select %p333, %s22, 1
      %s335 = smul.addr %s334, 4
      %s336 = scalar_lea.vmem %s1, %s335
      %p337 = pneg %p69
      %p338 = pneg %p66
      %p339 = pneg %p90
      %p340 = pneg %p87
      %p341 = pneg %p111
      %p342 = pneg %p108
      %p343 = pneg %p132
      %p344 = pneg %p129
      %p345 = pneg %p153
      %p346 = pneg %p150
      %p347 = pneg %p174
      %p348 = pneg %p171
      %p349 = pneg %p195
      %p350 = pneg %p192
      %p351 = pneg %p216
      %p352 = pneg %p213
      %p353 = pneg %p237
      %p354 = pneg %p234
      %p355 = pneg %p263
      %p356 = pneg %p260
      %p357 = scmp.lt.s32.totalorder %s22, 1
      %s358 = scalar_select %p357, %s22, 1
      %s359 = smul.addr %s358, 8
      %s360 = scalar_lea.vmem %s10, %s359
      %p361 = scmp.lt.s32.totalorder %s22, 1
      %s362 = scalar_select %p361, %s22, 1
      %s363 = smul.addr %s362, 4
      %s364 = scalar_lea.vmem %s0, %s363
      %p365 = scmp.lt.s32.totalorder %s22, 1
      %s366 = scalar_select %p365, %s22, 1
      %s367 = smul.addr %s366, 4
      %s368 = scalar_lea.vmem %s1, %s367
      %p369 = scmp.lt.s32.totalorder %s22, 1
      %s370 = scalar_select %p369, %s22, 1
      %s371 = smul.addr %s370, 8
      %s372 = scalar_lea.vmem %s10, %s371
      %v373 = vld [vmem:[%s364] sm:$0xf]
      %v374 = vld [vmem:[%s368] sm:$0xf]
      %s375 = sld [smem:[#allocation4]]
      %vm376 = vcmp.ge.f32.partialorder %v373, 0.0
      %v377 = vstv %s375
      %v378 = vmul.f32 %v377, %v373
      %v379 = vsel %vm376, %v373, %v378
      %v380 = vld [vmem:[%s3] sm:$0xf]
      %v381 = vld [vmem:[%s4] sm:$0xf]
      %383 = vset.pattern.permute.xlu0 0
      %384 = vperm.xlu0 %383, %v381
      %v385 = vpop.permute.xlu0 %384
      %vm387 = vcmask 31744
      %v389 = vsel %vm387, %v380, 0
      %vm391 = vcmask 1043456
      %v393 = vsel %vm391, %v379, 0
      %395 = vmatprep.subr.mxu0 0.0
      %396 = vmatpush1.msra.mxu0 %v393
      %397 = vmatprep.subr.mxu0 0.0
      %398 = vmatpush1.msra.mxu0 0.0
      %399 = vmatprep.subr.mxu0 0.0
      %400 = vmatpush1.msra.mxu0 0.0
      %401 = vmatprep.subr.mxu0 0.0
      %402 = vmatpush1.msra.mxu0 0.0
      %403 = vmatprep.subr.mxu0 0.0
      %404 = vmatpush1.msra.mxu0 0.0
      %405 = vmatprep.subr.mxu0 0.0
      %406 = vmatpush1.msra.mxu0 0.0
      %407 = vmatprep.subr.mxu0 0.0
      %408 = vmatpush1.msra.mxu0 0.0
      %409 = vmatprep.subr.mxu0 0.0
      %410 = vmatpush1.msra.mxu0 0.0
      %411 = vmatprep.subr.mxu0 0.0
      %412 = vmatpush1.msra.mxu0 0.0
      %413 = vmatprep.subr.mxu0 0.0
      %414 = vmatpush1.msra.mxu0 0.0
      %415 = vmatprep.subr.mxu0 0.0
      %416 = vmatpush1.msra.mxu0 0.0
      %417 = vmatprep.subr.mxu0 0.0
      %418 = vmatpush1.msra.mxu0 0.0
      %419 = vmatprep.subr.mxu0 0.0
      %420 = vmatpush1.msra.mxu0 0.0
      %421 = vmatprep.subr.mxu0 0.0
      %422 = vmatpush1.msra.mxu0 0.0
      %423 = vmatprep.subr.mxu0 0.0
      %424 = vmatpush1.msra.mxu0 0.0
      %425 = vmatprep.subr.mxu0 0.0
      %426 = vmatpush1.msra.mxu0 0.0
      %427 = vmatprep.subr.mxu0 0.0
      %428 = vmatpush1.msra.mxu0 0.0
      %429 = vmatprep.subr.mxu0 0.0
      %430 = vmatpush1.msra.mxu0 0.0
      %431 = vmatprep.subr.mxu0 0.0
      %432 = vmatpush1.msra.mxu0 0.0
      %433 = vmatprep.subr.mxu0 0.0
      %434 = vmatpush1.msra.mxu0 0.0
      %435 = vmatprep.subr.mxu0 0.0
      %436 = vmatpush1.msra.mxu0 0.0
      %437 = vmatprep.subr.mxu0 0.0
      %438 = vmatpush1.msra.mxu0 0.0
      %439 = vmatprep.subr.mxu0 0.0
      %440 = vmatpush1.msra.mxu0 0.0
      %441 = vmatprep.subr.mxu0 0.0
      %442 = vmatpush1.msra.mxu0 0.0
      %443 = vmatprep.subr.mxu0 0.0
      %444 = vmatpush1.msra.mxu0 0.0
      %445 = vmatprep.subr.mxu0 0.0
      %446 = vmatpush1.msra.mxu0 0.0
      %447 = vmatprep.subr.mxu0 0.0
      %448 = vmatpush1.msra.mxu0 0.0
      %449 = vmatprep.subr.mxu0 0.0
      %450 = vmatpush1.msra.mxu0 0.0
      %451 = vmatprep.subr.mxu0 0.0
      %452 = vmatpush1.msra.mxu0 0.0
      %453 = vmatprep.subr.mxu0 0.0
      %454 = vmatpush1.msra.mxu0 0.0
      %455 = vmatprep.subr.mxu0 0.0
      %456 = vmatpush1.msra.mxu0 0.0
      %457 = vmatprep.subr.mxu0 0.0
      %458 = vmatpush1.msra.mxu0 0.0
      %459 = vmatprep.mubr.f32.mxu0 0.0
      %460 = vmatmul.mubr.f32.gmra.mrb[0].mxu0 %v389
      %v461 = vpop.f32.mrb[0].mxu0
      %v462 = vadd.f32 %v385, %v461
      %v463 = vpop.f32.mrb[0].mxu0
      %464 = vdwg.mxu0
      %v465 = vmax.f32 %v462, 0.0
      %v466 = vmul.f32 %v465, %v374
      %v468 = vrot.slane %v466, 2
      %v470 = vsub.f32 %v466, %v468
      %v472 = vrot.slane %v374, 2
      %v474 = vmul.f32 %v465, %v472
      %v475 = vrot.slane %v374, 6
      %v477 = vmul.f32 %v465, %v475
      %v479 = vrot.slane %v477, 2
      %v481 = vadd.f32 %v474, %v479
      %v483 = vrot.slane %v481, 6
      %vm485 = vcmask 1041408
      %v486 = vsel %vm485, %v470, %v483
      %v487 = vld [vmem:[%s6] sm:$0x3]
      %489 = vset.pattern.permute.xlu0 0
      %490 = vperm.xlu0 %489, %v487
      %v491 = vpop.permute.xlu0 %490
      %v493 = vadd.f32 %v491, 0.0
      %495 = vrot.lane.b32.xlu0 %v486, 10
      %v496 = vpop.permute.xlu0 %495
      %vm498 = vcmask 80896
      %v499 = vsel %vm498, 0.0, %v496
      %v500 = vld [vmem:[%s7] sm:$0x1]
      %v501 = vlaneseq
      %v502 = vshrl.u32 %v501, 7
      %v503 = vsub.s32 0, %v502
      %v504 = vrot.slane %v500, %v503
      %v505 = vmul.f32 %v499, %v504
      %v506 = vld [vmem:[%s5] sm:$0x3]
      %v508 = vsel %vm387, %v506, 0
      %v511 = vsel %vm391, %v505, 0
      %513 = vmatprep.subr.mxu0 0.0
      %514 = vmatpush1.msra.mxu0 %v511
      %515 = vmatprep.subr.mxu0 0.0
      %516 = vmatpush1.msra.mxu0 0.0
      %517 = vmatprep.subr.mxu0 0.0
      %518 = vmatpush1.msra.mxu0 0.0
      %519 = vmatprep.subr.mxu0 0.0
      %520 = vmatpush1.msra.mxu0 0.0
      %521 = vmatprep.subr.mxu0 0.0
      %522 = vmatpush1.msra.mxu0 0.0
      %523 = vmatprep.subr.mxu0 0.0
      %524 = vmatpush1.msra.mxu0 0.0
      %525 = vmatprep.subr.mxu0 0.0
      %526 = vmatpush1.msra.mxu0 0.0
      %527 = vmatprep.subr.mxu0 0.0
      %528 = vmatpush1.msra.mxu0 0.0
      %529 = vmatprep.subr.mxu0 0.0
      %530 = vmatpush1.msra.mxu0 0.0
      %531 = vmatprep.subr.mxu0 0.0
      %532 = vmatpush1.msra.mxu0 0.0
      %533 = vmatprep.subr.mxu0 0.0
      %534 = vmatpush1.msra.mxu0 0.0
      %535 = vmatprep.subr.mxu0 0.0
      %536 = vmatpush1.msra.mxu0 0.0
      %537 = vmatprep.subr.mxu0 0.0
      %538 = vmatpush1.msra.mxu0 0.0
      %539 = vmatprep.subr.mxu0 0.0
      %540 = vmatpush1.msra.mxu0 0.0
      %541 = vmatprep.subr.mxu0 0.0
      %542 = vmatpush1.msra.mxu0 0.0
      %543 = vmatprep.subr.mxu0 0.0
      %544 = vmatpush1.msra.mxu0 0.0
      %545 = vmatprep.subr.mxu0 0.0
      %546 = vmatpush1.msra.mxu0 0.0
      %547 = vmatprep.subr.mxu0 0.0
      %548 = vmatpush1.msra.mxu0 0.0
      %549 = vmatprep.subr.mxu0 0.0
      %550 = vmatpush1.msra.mxu0 0.0
      %551 = vmatprep.subr.mxu0 0.0
      %552 = vmatpush1.msra.mxu0 0.0
      %553 = vmatprep.subr.mxu0 0.0
      %554 = vmatpush1.msra.mxu0 0.0
      %555 = vmatprep.subr.mxu0 0.0
      %556 = vmatpush1.msra.mxu0 0.0
      %557 = vmatprep.subr.mxu0 0.0
      %558 = vmatpush1.msra.mxu0 0.0
      %559 = vmatprep.subr.mxu0 0.0
      %560 = vmatpush1.msra.mxu0 0.0
      %561 = vmatprep.subr.mxu0 0.0
      %562 = vmatpush1.msra.mxu0 0.0
      %563 = vmatprep.subr.mxu0 0.0
      %564 = vmatpush1.msra.mxu0 0.0
      %565 = vmatprep.subr.mxu0 0.0
      %566 = vmatpush1.msra.mxu0 0.0
      %567 = vmatprep.subr.mxu0 0.0
      %568 = vmatpush1.msra.mxu0 0.0
      %569 = vmatprep.subr.mxu0 0.0
      %570 = vmatpush1.msra.mxu0 0.0
      %571 = vmatprep.subr.mxu0 0.0
      %572 = vmatpush1.msra.mxu0 0.0
      %573 = vmatprep.subr.mxu0 0.0
      %574 = vmatpush1.msra.mxu0 0.0
      %575 = vmatprep.subr.mxu0 0.0
      %576 = vmatpush1.msra.mxu0 0.0
      %577 = vmatprep.mubr.f32.mxu0 0.0
      %578 = vmatmul.mubr.f32.gmra.mrb[0].mxu0 %v508
      %v579 = vpop.f32.mrb[0].mxu0
      %v580 = vadd.f32 0.0, %v579
      %v581 = vpop.f32.mrb[0].mxu0
      %582 = vdwg.mxu0
      %v583 = vadd.f32 %v493, %v580
      %584 = vrot.lane.b32.xlu0 %v486, 9
      %v585 = vpop.permute.xlu0 %584
      %vm587 = vcmask 72704
      %v588 = vsel %vm587, 0.0, %v585
      %v589 = vld [vmem:[%s5 + $0x2] sm:$0x3]
      %v591 = vsel %vm387, %v589, 0
      %v594 = vsel %vm391, %v588, 0
      %596 = vmatprep.subr.mxu0 0.0
      %597 = vmatpush1.msra.mxu0 %v594
      %598 = vmatprep.subr.mxu0 0.0
      %599 = vmatpush1.msra.mxu0 0.0
      %600 = vmatprep.subr.mxu0 0.0
      %601 = vmatpush1.msra.mxu0 0.0
      %602 = vmatprep.subr.mxu0 0.0
      %603 = vmatpush1.msra.mxu0 0.0
      %604 = vmatprep.subr.mxu0 0.0
      %605 = vmatpush1.msra.mxu0 0.0
      %606 = vmatprep.subr.mxu0 0.0
      %607 = vmatpush1.msra.mxu0 0.0
      %608 = vmatprep.subr.mxu0 0.0
      %609 = vmatpush1.msra.mxu0 0.0
      %610 = vmatprep.subr.mxu0 0.0
      %611 = vmatpush1.msra.mxu0 0.0
      %612 = vmatprep.subr.mxu0 0.0
      %613 = vmatpush1.msra.mxu0 0.0
      %614 = vmatprep.subr.mxu0 0.0
      %615 = vmatpush1.msra.mxu0 0.0
      %616 = vmatprep.subr.mxu0 0.0
      %617 = vmatpush1.msra.mxu0 0.0
      %618 = vmatprep.subr.mxu0 0.0
      %619 = vmatpush1.msra.mxu0 0.0
      %620 = vmatprep.subr.mxu0 0.0
      %621 = vmatpush1.msra.mxu0 0.0
      %622 = vmatprep.subr.mxu0 0.0
      %623 = vmatpush1.msra.mxu0 0.0
      %624 = vmatprep.subr.mxu0 0.0
      %625 = vmatpush1.msra.mxu0 0.0
      %626 = vmatprep.subr.mxu0 0.0
      %627 = vmatpush1.msra.mxu0 0.0
      %628 = vmatprep.subr.mxu0 0.0
      %629 = vmatpush1.msra.mxu0 0.0
      %630 = vmatprep.subr.mxu0 0.0
      %631 = vmatpush1.msra.mxu0 0.0
      %632 = vmatprep.subr.mxu0 0.0
      %633 = vmatpush1.msra.mxu0 0.0
      %634 = vmatprep.subr.mxu0 0.0
      %635 = vmatpush1.msra.mxu0 0.0
      %636 = vmatprep.subr.mxu0 0.0
      %637 = vmatpush1.msra.mxu0 0.0
      %638 = vmatprep.subr.mxu0 0.0
      %639 = vmatpush1.msra.mxu0 0.0
      %640 = vmatprep.subr.mxu0 0.0
      %641 = vmatpush1.msra.mxu0 0.0
      %642 = vmatprep.subr.mxu0 0.0
      %643 = vmatpush1.msra.mxu0 0.0
      %644 = vmatprep.subr.mxu0 0.0
      %645 = vmatpush1.msra.mxu0 0.0
      %646 = vmatprep.subr.mxu0 0.0
      %647 = vmatpush1.msra.mxu0 0.0
      %648 = vmatprep.subr.mxu0 0.0
      %649 = vmatpush1.msra.mxu0 0.0
      %650 = vmatprep.subr.mxu0 0.0
      %651 = vmatpush1.msra.mxu0 0.0
      %652 = vmatprep.subr.mxu0 0.0
      %653 = vmatpush1.msra.mxu0 0.0
      %654 = vmatprep.subr.mxu0 0.0
      %655 = vmatpush1.msra.mxu0 0.0
      %656 = vmatprep.subr.mxu0 0.0
      %657 = vmatpush1.msra.mxu0 0.0
      %658 = vmatprep.subr.mxu0 0.0
      %659 = vmatpush1.msra.mxu0 0.0
      %660 = vmatprep.mubr.f32.mxu0 0.0
      %661 = vmatmul.mubr.f32.gmra.mrb[0].mxu0 %v591
      %v662 = vpop.f32.mrb[0].mxu0
      %v663 = vadd.f32 0.0, %v662
      %v664 = vpop.f32.mrb[0].mxu0
      %665 = vdwg.mxu0
      %v666 = vadd.f32 %v583, %v663
      %667 = vrot.lane.b32.xlu0 %v486, 8
      %v668 = vpop.permute.xlu0 %667
      %vm670 = vcmask 64512
      %v671 = vsel %vm670, 0.0, %v668
      %v672 = vld [vmem:[%s7 + $0x1] sm:$0x1]
      %v673 = vlaneseq
      %v674 = vshrl.u32 %v673, 7
      %v675 = vsub.s32 0, %v674
      %v676 = vrot.slane %v672, %v675
      %v677 = vmul.f32 %v671, %v676
      %v678 = vld [vmem:[%s5 + $0x4] sm:$0x3]
      %v680 = vsel %vm387, %v678, 0
      %v683 = vsel %vm391, %v677, 0
      %685 = vmatprep.subr.mxu0 0.0
      %686 = vmatpush1.msra.mxu0 %v683
      %687 = vmatprep.subr.mxu0 0.0
      %688 = vmatpush1.msra.mxu0 0.0
      %689 = vmatprep.subr.mxu0 0.0
      %690 = vmatpush1.msra.mxu0 0.0
      %691 = vmatprep.subr.mxu0 0.0
      %692 = vmatpush1.msra.mxu0 0.0
      %693 = vmatprep.subr.mxu0 0.0
      %694 = vmatpush1.msra.mxu0 0.0
      %695 = vmatprep.subr.mxu0 0.0
      %696 = vmatpush1.msra.mxu0 0.0
      %697 = vmatprep.subr.mxu0 0.0
      %698 = vmatpush1.msra.mxu0 0.0
      %699 = vmatprep.subr.mxu0 0.0
      %700 = vmatpush1.msra.mxu0 0.0
      %701 = vmatprep.subr.mxu0 0.0
      %702 = vmatpush1.msra.mxu0 0.0
      %703 = vmatprep.subr.mxu0 0.0
      %704 = vmatpush1.msra.mxu0 0.0
      %705 = vmatprep.subr.mxu0 0.0
      %706 = vmatpush1.msra.mxu0 0.0
      %707 = vmatprep.subr.mxu0 0.0
      %708 = vmatpush1.msra.mxu0 0.0
      %709 = vmatprep.subr.mxu0 0.0
      %710 = vmatpush1.msra.mxu0 0.0
      %711 = vmatprep.subr.mxu0 0.0
      %712 = vmatpush1.msra.mxu0 0.0
      %713 = vmatprep.subr.mxu0 0.0
      %714 = vmatpush1.msra.mxu0 0.0
      %715 = vmatprep.subr.mxu0 0.0
      %716 = vmatpush1.msra.mxu0 0.0
      %717 = vmatprep.subr.mxu0 0.0
      %718 = vmatpush1.msra.mxu0 0.0
      %719 = vmatprep.subr.mxu0 0.0
      %720 = vmatpush1.msra.mxu0 0.0
      %721 = vmatprep.subr.mxu0 0.0
      %722 = vmatpush1.msra.mxu0 0.0
      %723 = vmatprep.subr.mxu0 0.0
      %724 = vmatpush1.msra.mxu0 0.0
      %725 = vmatprep.subr.mxu0 0.0
      %726 = vmatpush1.msra.mxu0 0.0
      %727 = vmatprep.subr.mxu0 0.0
      %728 = vmatpush1.msra.mxu0 0.0
      %729 = vmatprep.subr.mxu0 0.0
      %730 = vmatpush1.msra.mxu0 0.0
      %731 = vmatprep.subr.mxu0 0.0
      %732 = vmatpush1.msra.mxu0 0.0
      %733 = vmatprep.subr.mxu0 0.0
      %734 = vmatpush1.msra.mxu0 0.0
      %735 = vmatprep.subr.mxu0 0.0
      %736 = vmatpush1.msra.mxu0 0.0
      %737 = vmatprep.subr.mxu0 0.0
      %738 = vmatpush1.msra.mxu0 0.0
      %739 = vmatprep.subr.mxu0 0.0
      %740 = vmatpush1.msra.mxu0 0.0
      %741 = vmatprep.subr.mxu0 0.0
      %742 = vmatpush1.msra.mxu0 0.0
      %743 = vmatprep.subr.mxu0 0.0
      %744 = vmatpush1.msra.mxu0 0.0
      %745 = vmatprep.subr.mxu0 0.0
      %746 = vmatpush1.msra.mxu0 0.0
      %747 = vmatprep.subr.mxu0 0.0
      %748 = vmatpush1.msra.mxu0 0.0
      %749 = vmatprep.mubr.f32.mxu0 0.0
      %750 = vmatmul.mubr.f32.gmra.mrb[0].mxu0 %v680
      %v751 = vpop.f32.mrb[0].mxu0
      %v752 = vadd.f32 0.0, %v751
      %v753 = vpop.f32.mrb[0].mxu0
      %754 = vdwg.mxu0
      %v755 = vadd.f32 %v666, %v752
      %756 = vrot.lane.b32.xlu0 %v486, 1
      %v757 = vpop.permute.xlu0 %756
      %vm759 = vcmask 7168
      %v760 = vsel %vm759, 0.0, %v757
      %v761 = vmul.f32 %v760, %v504
      %v762 = vld [vmem:[%s5 + $0x6] sm:$0x3]
      %v764 = vsel %vm387, %v762, 0
      %v767 = vsel %vm391, %v761, 0
      %769 = vmatprep.subr.mxu0 0.0
      %770 = vmatpush1.msra.mxu0 %v767
      %771 = vmatprep.subr.mxu0 0.0
      %772 = vmatpush1.msra.mxu0 0.0
      %773 = vmatprep.subr.mxu0 0.0
      %774 = vmatpush1.msra.mxu0 0.0
      %775 = vmatprep.subr.mxu0 0.0
      %776 = vmatpush1.msra.mxu0 0.0
      %777 = vmatprep.subr.mxu0 0.0
      %778 = vmatpush1.msra.mxu0 0.0
      %779 = vmatprep.subr.mxu0 0.0
      %780 = vmatpush1.msra.mxu0 0.0
      %781 = vmatprep.subr.mxu0 0.0
      %782 = vmatpush1.msra.mxu0 0.0
      %783 = vmatprep.subr.mxu0 0.0
      %784 = vmatpush1.msra.mxu0 0.0
      %785 = vmatprep.subr.mxu0 0.0
      %786 = vmatpush1.msra.mxu0 0.0
      %787 = vmatprep.subr.mxu0 0.0
      %788 = vmatpush1.msra.mxu0 0.0
      %789 = vmatprep.subr.mxu0 0.0
      %790 = vmatpush1.msra.mxu0 0.0
      %791 = vmatprep.subr.mxu0 0.0
      %792 = vmatpush1.msra.mxu0 0.0
      %793 = vmatprep.subr.mxu0 0.0
      %794 = vmatpush1.msra.mxu0 0.0
      %795 = vmatprep.subr.mxu0 0.0
      %796 = vmatpush1.msra.mxu0 0.0
      %797 = vmatprep.subr.mxu0 0.0
      %798 = vmatpush1.msra.mxu0 0.0
      %799 = vmatprep.subr.mxu0 0.0
      %800 = vmatpush1.msra.mxu0 0.0
      %801 = vmatprep.subr.mxu0 0.0
      %802 = vmatpush1.msra.mxu0 0.0
      %803 = vmatprep.subr.mxu0 0.0
      %804 = vmatpush1.msra.mxu0 0.0
      %805 = vmatprep.subr.mxu0 0.0
      %806 = vmatpush1.msra.mxu0 0.0
      %807 = vmatprep.subr.mxu0 0.0
      %808 = vmatpush1.msra.mxu0 0.0
      %809 = vmatprep.subr.mxu0 0.0
      %810 = vmatpush1.msra.mxu0 0.0
      %811 = vmatprep.subr.mxu0 0.0
      %812 = vmatpush1.msra.mxu0 0.0
      %813 = vmatprep.subr.mxu0 0.0
      %814 = vmatpush1.msra.mxu0 0.0
      %815 = vmatprep.subr.mxu0 0.0
      %816 = vmatpush1.msra.mxu0 0.0
      %817 = vmatprep.subr.mxu0 0.0
      %818 = vmatpush1.msra.mxu0 0.0
      %819 = vmatprep.subr.mxu0 0.0
      %820 = vmatpush1.msra.mxu0 0.0
      %821 = vmatprep.subr.mxu0 0.0
      %822 = vmatpush1.msra.mxu0 0.0
      %823 = vmatprep.subr.mxu0 0.0
      %824 = vmatpush1.msra.mxu0 0.0
      %825 = vmatprep.subr.mxu0 0.0
      %826 = vmatpush1.msra.mxu0 0.0
      %827 = vmatprep.subr.mxu0 0.0
      %828 = vmatpush1.msra.mxu0 0.0
      %829 = vmatprep.subr.mxu0 0.0
      %830 = vmatpush1.msra.mxu0 0.0
      %831 = vmatprep.subr.mxu0 0.0
      %832 = vmatpush1.msra.mxu0 0.0
      %833 = vmatprep.mubr.f32.mxu0 0.0
      %834 = vmatmul.mubr.f32.gmra.mrb[0].mxu0 %v764
      %v835 = vpop.f32.mrb[0].mxu0
      %v836 = vadd.f32 0.0, %v835
      %v837 = vpop.f32.mrb[0].mxu0
      %838 = vdwg.mxu0
      %v839 = vadd.f32 %v755, %v836
      %v840 = vld [vmem:[%s5 + $0x8] sm:$0x3]
      %v842 = vsel %vm387, %v840, 0
      %v844 = vsel %vm391, %v486, 0
      %846 = vmatprep.subr.mxu0 0.0
      %847 = vmatpush1.msra.mxu0 %v844
      %848 = vmatprep.subr.mxu0 0.0
      %849 = vmatpush1.msra.mxu0 0.0
      %850 = vmatprep.subr.mxu0 0.0
      %851 = vmatpush1.msra.mxu0 0.0
      %852 = vmatprep.subr.mxu0 0.0
      %853 = vmatpush1.msra.mxu0 0.0
      %854 = vmatprep.subr.mxu0 0.0
      %855 = vmatpush1.msra.mxu0 0.0
      %856 = vmatprep.subr.mxu0 0.0
      %857 = vmatpush1.msra.mxu0 0.0
      %858 = vmatprep.subr.mxu0 0.0
      %859 = vmatpush1.msra.mxu0 0.0
      %860 = vmatprep.subr.mxu0 0.0
      %861 = vmatpush1.msra.mxu0 0.0
      %862 = vmatprep.subr.mxu0 0.0
      %863 = vmatpush1.msra.mxu0 0.0
      %864 = vmatprep.subr.mxu0 0.0
      %865 = vmatpush1.msra.mxu0 0.0
      %866 = vmatprep.subr.mxu0 0.0
      %867 = vmatpush1.msra.mxu0 0.0
      %868 = vmatprep.subr.mxu0 0.0
      %869 = vmatpush1.msra.mxu0 0.0
      %870 = vmatprep.subr.mxu0 0.0
      %871 = vmatpush1.msra.mxu0 0.0
      %872 = vmatprep.subr.mxu0 0.0
      %873 = vmatpush1.msra.mxu0 0.0
      %874 = vmatprep.subr.mxu0 0.0
      %875 = vmatpush1.msra.mxu0 0.0
      %876 = vmatprep.subr.mxu0 0.0
      %877 = vmatpush1.msra.mxu0 0.0
      %878 = vmatprep.subr.mxu0 0.0
      %879 = vmatpush1.msra.mxu0 0.0
      %880 = vmatprep.subr.mxu0 0.0
      %881 = vmatpush1.msra.mxu0 0.0
      %882 = vmatprep.subr.mxu0 0.0
      %883 = vmatpush1.msra.mxu0 0.0
      %884 = vmatprep.subr.mxu0 0.0
      %885 = vmatpush1.msra.mxu0 0.0
      %886 = vmatprep.subr.mxu0 0.0
      %887 = vmatpush1.msra.mxu0 0.0
      %888 = vmatprep.subr.mxu0 0.0
      %889 = vmatpush1.msra.mxu0 0.0
      %890 = vmatprep.subr.mxu0 0.0
      %891 = vmatpush1.msra.mxu0 0.0
      %892 = vmatprep.subr.mxu0 0.0
      %893 = vmatpush1.msra.mxu0 0.0
      %894 = vmatprep.subr.mxu0 0.0
      %895 = vmatpush1.msra.mxu0 0.0
      %896 = vmatprep.subr.mxu0 0.0
      %897 = vmatpush1.msra.mxu0 0.0
      %898 = vmatprep.subr.mxu0 0.0
      %899 = vmatpush1.msra.mxu0 0.0
      %900 = vmatprep.subr.mxu0 0.0
      %901 = vmatpush1.msra.mxu0 0.0
      %902 = vmatprep.subr.mxu0 0.0
      %903 = vmatpush1.msra.mxu0 0.0
      %904 = vmatprep.subr.mxu0 0.0
      %905 = vmatpush1.msra.mxu0 0.0
      %906 = vmatprep.subr.mxu0 0.0
      %907 = vmatpush1.msra.mxu0 0.0
      %908 = vmatprep.subr.mxu0 0.0
      %909 = vmatpush1.msra.mxu0 0.0
      %910 = vmatprep.mubr.f32.mxu0 0.0
      %911 = vmatmul.mubr.f32.gmra.mrb[0].mxu0 %v842
      %v912 = vpop.f32.mrb[0].mxu0
      %v913 = vadd.f32 0.0, %v912
      %v914 = vpop.f32.mrb[0].mxu0
      %915 = vdwg.mxu0
      %v916 = vadd.f32 %v839, %v913
      %917 = vrot.lane.b32.xlu0 %v486, 127
      %v918 = vpop.permute.xlu0 %917
      %vm920 = vcmask 580608
      %v921 = vsel %vm920, %v918, 0.0
      %v922 = vmul.f32 %v921, %v676
      %v923 = vld [vmem:[%s5 + $0xa] sm:$0x3]
      %v925 = vsel %vm387, %v923, 0
      %v928 = vsel %vm391, %v922, 0
      %930 = vmatprep.subr.mxu0 0.0
      %931 = vmatpush1.msra.mxu0 %v928
      %932 = vmatprep.subr.mxu0 0.0
      %933 = vmatpush1.msra.mxu0 0.0
      %934 = vmatprep.subr.mxu0 0.0
      %935 = vmatpush1.msra.mxu0 0.0
      %936 = vmatprep.subr.mxu0 0.0
      %937 = vmatpush1.msra.mxu0 0.0
      %938 = vmatprep.subr.mxu0 0.0
      %939 = vmatpush1.msra.mxu0 0.0
      %940 = vmatprep.subr.mxu0 0.0
      %941 = vmatpush1.msra.mxu0 0.0
      %942 = vmatprep.subr.mxu0 0.0
      %943 = vmatpush1.msra.mxu0 0.0
      %944 = vmatprep.subr.mxu0 0.0
      %945 = vmatpush1.msra.mxu0 0.0
      %946 = vmatprep.subr.mxu0 0.0
      %947 = vmatpush1.msra.mxu0 0.0
      %948 = vmatprep.subr.mxu0 0.0
      %949 = vmatpush1.msra.mxu0 0.0
      %950 = vmatprep.subr.mxu0 0.0
      %951 = vmatpush1.msra.mxu0 0.0
      %952 = vmatprep.subr.mxu0 0.0
      %953 = vmatpush1.msra.mxu0 0.0
      %954 = vmatprep.subr.mxu0 0.0
      %955 = vmatpush1.msra.mxu0 0.0
      %956 = vmatprep.subr.mxu0 0.0
      %957 = vmatpush1.msra.mxu0 0.0
      %958 = vmatprep.subr.mxu0 0.0
      %959 = vmatpush1.msra.mxu0 0.0
      %960 = vmatprep.subr.mxu0 0.0
      %961 = vmatpush1.msra.mxu0 0.0
      %962 = vmatprep.subr.mxu0 0.0
      %963 = vmatpush1.msra.mxu0 0.0
      %964 = vmatprep.subr.mxu0 0.0
      %965 = vmatpush1.msra.mxu0 0.0
      %966 = vmatprep.subr.mxu0 0.0
      %967 = vmatpush1.msra.mxu0 0.0
      %968 = vmatprep.subr.mxu0 0.0
      %969 = vmatpush1.msra.mxu0 0.0
      %970 = vmatprep.subr.mxu0 0.0
      %971 = vmatpush1.msra.mxu0 0.0
      %972 = vmatprep.subr.mxu0 0.0
      %973 = vmatpush1.msra.mxu0 0.0
      %974 = vmatprep.subr.mxu0 0.0
      %975 = vmatpush1.msra.mxu0 0.0
      %976 = vmatprep.subr.mxu0 0.0
      %977 = vmatpush1.msra.mxu0 0.0
      %978 = vmatprep.subr.mxu0 0.0
      %979 = vmatpush1.msra.mxu0 0.0
      %980 = vmatprep.subr.mxu0 0.0
      %981 = vmatpush1.msra.mxu0 0.0
      %982 = vmatprep.subr.mxu0 0.0
      %983 = vmatpush1.msra.mxu0 0.0
      %984 = vmatprep.subr.mxu0 0.0
      %985 = vmatpush1.msra.mxu0 0.0
      %986 = vmatprep.subr.mxu0 0.0
      %987 = vmatpush1.msra.mxu0 0.0
      %988 = vmatprep.subr.mxu0 0.0
      %989 = vmatpush1.msra.mxu0 0.0
      %990 = vmatprep.subr.mxu0 0.0
      %991 = vmatpush1.msra.mxu0 0.0
      %992 = vmatprep.subr.mxu0 0.0
      %993 = vmatpush1.msra.mxu0 0.0
      %994 = vmatprep.mubr.f32.mxu0 0.0
      %995 = vmatmul.mubr.f32.gmra.mrb[0].mxu0 %v925
      %v996 = vpop.f32.mrb[0].mxu0
      %v997 = vadd.f32 0.0, %v996
      %v998 = vpop.f32.mrb[0].mxu0
      %999 = vdwg.mxu0
      %v1000 = vadd.f32 %v916, %v997
      %1001 = vrot.lane.b32.xlu0 %v486, 120
      %v1002 = vpop.permute.xlu0 %1001
      %vm1004 = vcmask 523264
      %v1005 = vsel %vm1004, %v1002, 0.0
      %v1006 = vmul.f32 %v1005, %v504
      %v1007 = vld [vmem:[%s5 + $0xc] sm:$0x3]
      %v1009 = vsel %vm387, %v1007, 0
      %v1012 = vsel %vm391, %v1006, 0
      %1014 = vmatprep.subr.mxu0 0.0
      %1015 = vmatpush1.msra.mxu0 %v1012
      %1016 = vmatprep.subr.mxu0 0.0
      %1017 = vmatpush1.msra.mxu0 0.0
      %1018 = vmatprep.subr.mxu0 0.0
      %1019 = vmatpush1.msra.mxu0 0.0
      %1020 = vmatprep.subr.mxu0 0.0
      %1021 = vmatpush1.msra.mxu0 0.0
      %1022 = vmatprep.subr.mxu0 0.0
      %1023 = vmatpush1.msra.mxu0 0.0
      %1024 = vmatprep.subr.mxu0 0.0
      %1025 = vmatpush1.msra.mxu0 0.0
      %1026 = vmatprep.subr.mxu0 0.0
      %1027 = vmatpush1.msra.mxu0 0.0
      %1028 = vmatprep.subr.mxu0 0.0
      %1029 = vmatpush1.msra.mxu0 0.0
      %1030 = vmatprep.subr.mxu0 0.0
      %1031 = vmatpush1.msra.mxu0 0.0
      %1032 = vmatprep.subr.mxu0 0.0
      %1033 = vmatpush1.msra.mxu0 0.0
      %1034 = vmatprep.subr.mxu0 0.0
      %1035 = vmatpush1.msra.mxu0 0.0
      %1036 = vmatprep.subr.mxu0 0.0
      %1037 = vmatpush1.msra.mxu0 0.0
      %1038 = vmatprep.subr.mxu0 0.0
      %1039 = vmatpush1.msra.mxu0 0.0
      %1040 = vmatprep.subr.mxu0 0.0
      %1041 = vmatpush1.msra.mxu0 0.0
      %1042 = vmatprep.subr.mxu0 0.0
      %1043 = vmatpush1.msra.mxu0 0.0
      %1044 = vmatprep.subr.mxu0 0.0
      %1045 = vmatpush1.msra.mxu0 0.0
      %1046 = vmatprep.subr.mxu0 0.0
      %1047 = vmatpush1.msra.mxu0 0.0
      %1048 = vmatprep.subr.mxu0 0.0
      %1049 = vmatpush1.msra.mxu0 0.0
      %1050 = vmatprep.subr.mxu0 0.0
      %1051 = vmatpush1.msra.mxu0 0.0
      %1052 = vmatprep.subr.mxu0 0.0
      %1053 = vmatpush1.msra.mxu0 0.0
      %1054 = vmatprep.subr.mxu0 0.0
      %1055 = vmatpush1.msra.mxu0 0.0
      %1056 = vmatprep.subr.mxu0 0.0
      %1057 = vmatpush1.msra.mxu0 0.0
      %1058 = vmatprep.subr.mxu0 0.0
      %1059 = vmatpush1.msra.mxu0 0.0
      %1060 = vmatprep.subr.mxu0 0.0
      %1061 = vmatpush1.msra.mxu0 0.0
      %1062 = vmatprep.subr.mxu0 0.0
      %1063 = vmatpush1.msra.mxu0 0.0
      %1064 = vmatprep.subr.mxu0 0.0
      %1065 = vmatpush1.msra.mxu0 0.0
      %1066 = vmatprep.subr.mxu0 0.0
      %1067 = vmatpush1.msra.mxu0 0.0
      %1068 = vmatprep.subr.mxu0 0.0
      %1069 = vmatpush1.msra.mxu0 0.0
      %1070 = vmatprep.subr.mxu0 0.0
      %1071 = vmatpush1.msra.mxu0 0.0
      %1072 = vmatprep.subr.mxu0 0.0
      %1073 = vmatpush1.msra.mxu0 0.0
      %1074 = vmatprep.subr.mxu0 0.0
      %1075 = vmatpush1.msra.mxu0 0.0
      %1076 = vmatprep.subr.mxu0 0.0
      %1077 = vmatpush1.msra.mxu0 0.0
      %1078 = vmatprep.mubr.f32.mxu0 0.0
      %1079 = vmatmul.mubr.f32.gmra.mrb[0].mxu0 %v1009
      %v1080 = vpop.f32.mrb[0].mxu0
      %v1081 = vadd.f32 0.0, %v1080
      %v1082 = vpop.f32.mrb[0].mxu0
      %1083 = vdwg.mxu0
      %v1084 = vadd.f32 %v1000, %v1081
      %1085 = vrot.lane.b32.xlu0 %v486, 119
      %v1086 = vpop.permute.xlu0 %1085
      %vm1088 = vcmask 515072
      %v1089 = vsel %vm1088, %v1086, 0.0
      %v1090 = vld [vmem:[%s5 + $0xe] sm:$0x3]
      %v1092 = vsel %vm387, %v1090, 0
      %v1095 = vsel %vm391, %v1089, 0
      %1097 = vmatprep.subr.mxu0 0.0
      %1098 = vmatpush1.msra.mxu0 %v1095
      %1099 = vmatprep.subr.mxu0 0.0
      %1100 = vmatpush1.msra.mxu0 0.0
      %1101 = vmatprep.subr.mxu0 0.0
      %1102 = vmatpush1.msra.mxu0 0.0
      %1103 = vmatprep.subr.mxu0 0.0
      %1104 = vmatpush1.msra.mxu0 0.0
      %1105 = vmatprep.subr.mxu0 0.0
      %1106 = vmatpush1.msra.mxu0 0.0
      %1107 = vmatprep.subr.mxu0 0.0
      %1108 = vmatpush1.msra.mxu0 0.0
      %1109 = vmatprep.subr.mxu0 0.0
      %1110 = vmatpush1.msra.mxu0 0.0
      %1111 = vmatprep.subr.mxu0 0.0
      %1112 = vmatpush1.msra.mxu0 0.0
      %1113 = vmatprep.subr.mxu0 0.0
      %1114 = vmatpush1.msra.mxu0 0.0
      %1115 = vmatprep.subr.mxu0 0.0
      %1116 = vmatpush1.msra.mxu0 0.0
      %1117 = vmatprep.subr.mxu0 0.0
      %1118 = vmatpush1.msra.mxu0 0.0
      %1119 = vmatprep.subr.mxu0 0.0
      %1120 = vmatpush1.msra.mxu0 0.0
      %1121 = vmatprep.subr.mxu0 0.0
      %1122 = vmatpush1.msra.mxu0 0.0
      %1123 = vmatprep.subr.mxu0 0.0
      %1124 = vmatpush1.msra.mxu0 0.0
      %1125 = vmatprep.subr.mxu0 0.0
      %1126 = vmatpush1.msra.mxu0 0.0
      %1127 = vmatprep.subr.mxu0 0.0
      %1128 = vmatpush1.msra.mxu0 0.0
      %1129 = vmatprep.subr.mxu0 0.0
      %1130 = vmatpush1.msra.mxu0 0.0
      %1131 = vmatprep.subr.mxu0 0.0
      %1132 = vmatpush1.msra.mxu0 0.0
      %1133 = vmatprep.subr.mxu0 0.0
      %1134 = vmatpush1.msra.mxu0 0.0
      %1135 = vmatprep.subr.mxu0 0.0
      %1136 = vmatpush1.msra.mxu0 0.0
      %1137 = vmatprep.subr.mxu0 0.0
      %1138 = vmatpush1.msra.mxu0 0.0
      %1139 = vmatprep.subr.mxu0 0.0
      %1140 = vmatpush1.msra.mxu0 0.0
      %1141 = vmatprep.subr.mxu0 0.0
      %1142 = vmatpush1.msra.mxu0 0.0
      %1143 = vmatprep.subr.mxu0 0.0
      %1144 = vmatpush1.msra.mxu0 0.0
      %1145 = vmatprep.subr.mxu0 0.0
      %1146 = vmatpush1.msra.mxu0 0.0
      %1147 = vmatprep.subr.mxu0 0.0
      %1148 = vmatpush1.msra.mxu0 0.0
      %1149 = vmatprep.subr.mxu0 0.0
      %1150 = vmatpush1.msra.mxu0 0.0
      %1151 = vmatprep.subr.mxu0 0.0
      %1152 = vmatpush1.msra.mxu0 0.0
      %1153 = vmatprep.subr.mxu0 0.0
      %1154 = vmatpush1.msra.mxu0 0.0
      %1155 = vmatprep.subr.mxu0 0.0
      %1156 = vmatpush1.msra.mxu0 0.0
      %1157 = vmatprep.subr.mxu0 0.0
      %1158 = vmatpush1.msra.mxu0 0.0
      %1159 = vmatprep.subr.mxu0 0.0
      %1160 = vmatpush1.msra.mxu0 0.0
      %1161 = vmatprep.mubr.f32.mxu0 0.0
      %1162 = vmatmul.mubr.f32.gmra.mrb[0].mxu0 %v1092
      %v1163 = vpop.f32.mrb[0].mxu0
      %v1164 = vadd.f32 0.0, %v1163
      %v1165 = vpop.f32.mrb[0].mxu0
      %1166 = vdwg.mxu0
      %v1167 = vadd.f32 %v1084, %v1164
      %1168 = vrot.lane.b32.xlu0 %v486, 118
      %v1169 = vpop.permute.xlu0 %1168
      %vm1171 = vcmask 506880
      %v1172 = vsel %vm1171, %v1169, 0.0
      %v1173 = vmul.f32 %v1172, %v676
      %v1174 = vld [vmem:[%s5 + $0x10] sm:$0x3]
      %v1176 = vsel %vm387, %v1174, 0
      %v1179 = vsel %vm391, %v1173, 0
      %1181 = vmatprep.subr.mxu0 0.0
      %1182 = vmatpush1.msra.mxu0 %v1179
      %1183 = vmatprep.subr.mxu0 0.0
      %1184 = vmatpush1.msra.mxu0 0.0
      %1185 = vmatprep.subr.mxu0 0.0
      %1186 = vmatpush1.msra.mxu0 0.0
      %1187 = vmatprep.subr.mxu0 0.0
      %1188 = vmatpush1.msra.mxu0 0.0
      %1189 = vmatprep.subr.mxu0 0.0
      %1190 = vmatpush1.msra.mxu0 0.0
      %1191 = vmatprep.subr.mxu0 0.0
      %1192 = vmatpush1.msra.mxu0 0.0
      %1193 = vmatprep.subr.mxu0 0.0
      %1194 = vmatpush1.msra.mxu0 0.0
      %1195 = vmatprep.subr.mxu0 0.0
      %1196 = vmatpush1.msra.mxu0 0.0
      %1197 = vmatprep.subr.mxu0 0.0
      %1198 = vmatpush1.msra.mxu0 0.0
      %1199 = vmatprep.subr.mxu0 0.0
      %1200 = vmatpush1.msra.mxu0 0.0
      %1201 = vmatprep.subr.mxu0 0.0
      %1202 = vmatpush1.msra.mxu0 0.0
      %1203 = vmatprep.subr.mxu0 0.0
      %1204 = vmatpush1.msra.mxu0 0.0
      %1205 = vmatprep.subr.mxu0 0.0
      %1206 = vmatpush1.msra.mxu0 0.0
      %1207 = vmatprep.subr.mxu0 0.0
      %1208 = vmatpush1.msra.mxu0 0.0
      %1209 = vmatprep.subr.mxu0 0.0
      %1210 = vmatpush1.msra.mxu0 0.0
      %1211 = vmatprep.subr.mxu0 0.0
      %1212 = vmatpush1.msra.mxu0 0.0
      %1213 = vmatprep.subr.mxu0 0.0
      %1214 = vmatpush1.msra.mxu0 0.0
      %1215 = vmatprep.subr.mxu0 0.0
      %1216 = vmatpush1.msra.mxu0 0.0
      %1217 = vmatprep.subr.mxu0 0.0
      %1218 = vmatpush1.msra.mxu0 0.0
      %1219 = vmatprep.subr.mxu0 0.0
      %1220 = vmatpush1.msra.mxu0 0.0
      %1221 = vmatprep.subr.mxu0 0.0
      %1222 = vmatpush1.msra.mxu0 0.0
      %1223 = vmatprep.subr.mxu0 0.0
      %1224 = vmatpush1.msra.mxu0 0.0
      %1225 = vmatprep.subr.mxu0 0.0
      %1226 = vmatpush1.msra.mxu0 0.0
      %1227 = vmatprep.subr.mxu0 0.0
      %1228 = vmatpush1.msra.mxu0 0.0
      %1229 = vmatprep.subr.mxu0 0.0
      %1230 = vmatpush1.msra.mxu0 0.0
      %1231 = vmatprep.subr.mxu0 0.0
      %1232 = vmatpush1.msra.mxu0 0.0
      %1233 = vmatprep.subr.mxu0 0.0
      %1234 = vmatpush1.msra.mxu0 0.0
      %1235 = vmatprep.subr.mxu0 0.0
      %1236 = vmatpush1.msra.mxu0 0.0
      %1237 = vmatprep.subr.mxu0 0.0
      %1238 = vmatpush1.msra.mxu0 0.0
      %1239 = vmatprep.subr.mxu0 0.0
      %1240 = vmatpush1.msra.mxu0 0.0
      %1241 = vmatprep.subr.mxu0 0.0
      %1242 = vmatpush1.msra.mxu0 0.0
      %1243 = vmatprep.subr.mxu0 0.0
      %1244 = vmatpush1.msra.mxu0 0.0
      %1245 = vmatprep.mubr.f32.mxu0 0.0
      %1246 = vmatmul.mubr.f32.gmra.mrb[0].mxu0 %v1176
      %v1247 = vpop.f32.mrb[0].mxu0
      %v1248 = vadd.f32 0.0, %v1247
      %v1249 = vpop.f32.mrb[0].mxu0
      %1250 = vdwg.mxu0
      %v1251 = vadd.f32 %v1167, %v1248
      %vm1252 = vcmask 65536
      %1253 = vst.msk [vmem:[#allocation2] sm:$0x1] %vm1252, %v1251
      %1255 = vrot.lane.b32.xlu0 %v1251, 9
      %v1256 = vpop.permute.xlu0 %1255
      %vm1258 = vcmask 140361
      %1259 = vst.msk [vmem:[#allocation2 - $0x1] sm:$0x2] %vm1258, %v1256
      %1260 = vrot.lane.b32.xlu0 %v1251, 119
      %v1261 = vpop.permute.xlu0 %1260
      %1263 = vst.msk [vmem:[#allocation2 + $0x1] sm:$0x1] %vm1252, %v1261
      %1264 = vst.msk [vmem:[#allocation2] sm:$0x2] %vm1258, %v1251
      %1265 = vrot.lane.b32.xlu0 %v1251, 110
      %v1266 = vpop.permute.xlu0 %1265
      %1268 = vst.msk [vmem:[#allocation2 + $0x2] sm:$0x1] %vm1252, %v1266
      %1269 = vst.msk [vmem:[#allocation2 + $0x1] sm:$0x2] %vm1258, %v1261
      %1270 = vrot.lane.b32.xlu0 %v1251, 101
      %v1271 = vpop.permute.xlu0 %1270
      %1273 = vst.msk [vmem:[#allocation2 + $0x3] sm:$0x1] %vm1252, %v1271
      %1274 = vst.msk [vmem:[#allocation2 + $0x2] sm:$0x2] %vm1258, %v1266
      %1275 = vrot.lane.b32.xlu0 %v1251, 92
      %v1276 = vpop.permute.xlu0 %1275
      %1278 = vst.msk [vmem:[#allocation2 + $0x4] sm:$0x1] %vm1252, %v1276
      %1279 = vst.msk [vmem:[#allocation2 + $0x3] sm:$0x2] %vm1258, %v1271
      %1280 = vrot.lane.b32.xlu0 %v1251, 83
      %v1281 = vpop.permute.xlu0 %1280
      %1283 = vst.msk [vmem:[#allocation2 + $0x5] sm:$0x1] %vm1252, %v1281
      %1284 = vst.msk [vmem:[#allocation2 + $0x4] sm:$0x2] %vm1258, %v1276
      %1285 = vrot.lane.b32.xlu0 %v1251, 74
      %v1286 = vpop.permute.xlu0 %1285
      %1288 = vst.msk [vmem:[#allocation2 + $0x6] sm:$0x1] %vm1252, %v1286
      %1289 = vst.msk [vmem:[#allocation2 + $0x5] sm:$0x2] %vm1258, %v1281
      %1290 = vrot.lane.b32.xlu0 %v1251, 65
      %v1291 = vpop.permute.xlu0 %1290
      %1293 = vst.msk [vmem:[#allocation2 + $0x7] sm:$0x1] %vm1252, %v1291
      %1294 = vst.msk [vmem:[#allocation2 + $0x6] sm:$0x2] %vm1258, %v1286
      %v1295 = vld [vmem:[#allocation2] sm:$0xff]
      %v1296 = vld [vmem:[%s8] sm:$0xff]
      %v1297 = vld [vmem:[%s8 + $0x8] sm:$0xff]
      %v1298 = vld [vmem:[%s8 + $0x10] sm:$0x3]
      %vm1299 = vcmask 146432
      %v1301 = vsel %vm1299, %v1295, 0
      %v1304 = vsel %vm485, %v1298, 0
      %1306 = vmatprep.subr.mxu0 0.0
      %1307 = vmatpush1.msra.mxu0 %v1296
      %1308 = vmatprep.subr.mxu0 0.0
      %1309 = vmatpush1.msra.mxu0 %v1297
      %1310 = vmatprep.subr.mxu0 0.0
      %1311 = vmatpush1.msra.mxu0 %v1304
      %1312 = vmatprep.subr.mxu0 0.0
      %1313 = vmatpush1.msra.mxu0 0.0
      %1314 = vmatprep.subr.mxu0 0.0
      %1315 = vmatpush1.msra.mxu0 0.0
      %1316 = vmatprep.subr.mxu0 0.0
      %1317 = vmatpush1.msra.mxu0 0.0
      %1318 = vmatprep.subr.mxu0 0.0
      %1319 = vmatpush1.msra.mxu0 0.0
      %1320 = vmatprep.subr.mxu0 0.0
      %1321 = vmatpush1.msra.mxu0 0.0
      %1322 = vmatprep.subr.mxu0 0.0
      %1323 = vmatpush1.msra.mxu0 0.0
      %1324 = vmatprep.subr.mxu0 0.0
      %1325 = vmatpush1.msra.mxu0 0.0
      %1326 = vmatprep.subr.mxu0 0.0
      %1327 = vmatpush1.msra.mxu0 0.0
      %1328 = vmatprep.subr.mxu0 0.0
      %1329 = vmatpush1.msra.mxu0 0.0
      %1330 = vmatprep.subr.mxu0 0.0
      %1331 = vmatpush1.msra.mxu0 0.0
      %1332 = vmatprep.subr.mxu0 0.0
      %1333 = vmatpush1.msra.mxu0 0.0
      %1334 = vmatprep.subr.mxu0 0.0
      %1335 = vmatpush1.msra.mxu0 0.0
      %1336 = vmatprep.subr.mxu0 0.0
      %1337 = vmatpush1.msra.mxu0 0.0
      %1338 = vmatprep.subr.mxu0 0.0
      %1339 = vmatpush1.msra.mxu0 0.0
      %1340 = vmatprep.subr.mxu0 0.0
      %1341 = vmatpush1.msra.mxu0 0.0
      %1342 = vmatprep.subr.mxu0 0.0
      %1343 = vmatpush1.msra.mxu0 0.0
      %1344 = vmatprep.subr.mxu0 0.0
      %1345 = vmatpush1.msra.mxu0 0.0
      %1346 = vmatprep.subr.mxu0 0.0
      %1347 = vmatpush1.msra.mxu0 0.0
      %1348 = vmatprep.subr.mxu0 0.0
      %1349 = vmatpush1.msra.mxu0 0.0
      %1350 = vmatprep.subr.mxu0 0.0
      %1351 = vmatpush1.msra.mxu0 0.0
      %1352 = vmatprep.subr.mxu0 0.0
      %1353 = vmatpush1.msra.mxu0 0.0
      %1354 = vmatprep.subr.mxu0 0.0
      %1355 = vmatpush1.msra.mxu0 0.0
      %1356 = vmatprep.subr.mxu0 0.0
      %1357 = vmatpush1.msra.mxu0 0.0
      %1358 = vmatprep.subr.mxu0 0.0
      %1359 = vmatpush1.msra.mxu0 0.0
      %1360 = vmatprep.subr.mxu0 0.0
      %1361 = vmatpush1.msra.mxu0 0.0
      %1362 = vmatprep.subr.mxu0 0.0
      %1363 = vmatpush1.msra.mxu0 0.0
      %1364 = vmatprep.subr.mxu0 0.0
      %1365 = vmatpush1.msra.mxu0 0.0
      %1366 = vmatprep.subr.mxu0 0.0
      %1367 = vmatpush1.msra.mxu0 0.0
      %1368 = vmatprep.subr.mxu0 0.0
      %1369 = vmatpush1.msra.mxu0 0.0
      %1370 = vmatprep.mubr.f32.mxu0 0.0
      %1371 = vmatmul.mubr.f32.gmra.mrb[0].mxu0 %v1301
      %v1372 = vpop.f32.mrb[0].mxu0
      %v1373 = vadd.f32 0.0, %v1372
      %v1374 = vpop.f32.mrb[0].mxu0
      %1375 = vdwg.mxu0
      %1376 = vst.msk [vmem:[#allocation3] sm:$0xff] %vm670, 0.0
      %vm1377 = vcmask 57344
      %1378 = vst.msk [vmem:[#allocation3 + $0x8] sm:$0x1] %vm1377, 0.0
      %v1379 = vld [vmem:[#allocation3] sm:$0xff]
      %v1380 = vadd.f32 %v1379, %v1373
      %1381 = vst.msk [vmem:[#allocation3] sm:$0xff] %vm670, %v1380
      %v1382 = vld [vmem:[#allocation3 + $0x1] sm:$0xff]
      %1384 = vrot.lane.b32.xlu0 %v1373, 120
      %v1385 = vpop.permute.xlu0 %1384
      %v1387 = vadd.f32 %v1382, %v1385
      %1388 = vst.msk [vmem:[#allocation3 + $0x1] sm:$0xff] %vm670, %v1387
      %v1389 = vld [vmem:[#allocation3 + $0x1] sm:$0x7f]
      %v1390 = vld [vmem:[%s9] sm:$0x7f]
      %v1391 = vmul.f32 %v1389, %v1390
      %vm1392 = vcmask 63488
      %1393 = vst.msk [vmem:[%s372] sm:$0x7f] %vm1392, %v1391
      %p1394 = scmp.lt.s32.totalorder %s22, 1
      %s1395 = scalar_select %p1394, %s22, 1
      %s1396 = smul.addr %s1395, 8
      %s1397 = scalar_lea.vmem %s10, %s1396
      // Predicated region
      $region61: #{tpu_custom_call.1} parent=59 // pred_check
        %p1398 = pneg %p260
      $region62: #{tpu_custom_call.1} parent=59 // pred_check_branch
        %1400 = sbr.rel (%p1398) target = $region64
      $region63: #{tpu_custom_call.1} parent=59 // pred_region
        _
      $region64: #{tpu_custom_call.1} parent=59 // pred_fallthru
        _
    $region60: #{tpu_custom_call.1} parent=5 // pred_fallthru
      _
    %p1401 = scmp.le.s32.totalorder 2, %s17
    // Predicated region
    $region65: #{tpu_custom_call.1} parent=5 // pred_check
      %p1402 = pneg %p1401
    $region66: #{tpu_custom_call.1} parent=5 // pred_check_branch
      %1404 = sbr.rel (%p1402) target = $region68
    $region67: #{tpu_custom_call.1} parent=5 // pred_region
      %s1405 = ssub.s32 %s17, 2
      // Predicated region
      $region69: #{tpu_custom_call.1} parent=67 // pred_check
        %p1406 = pneg %p266
      $region70: #{tpu_custom_call.1} parent=67 // pred_check_branch
        %1408 = sbr.rel (%p1406) target = $region72
      $region71: #{tpu_custom_call.1} parent=67 // pred_region
        %p1409 = scmp.lt.s32.totalorder %s23, 1
        %s1410 = scalar_select %p1409, %s23, 1
        %s1411 = smul.addr %s1410, 8
        %s1412 = scalar_lea.vmem %s10, %s1411
      $region72: #{tpu_custom_call.1} parent=67 // pred_fallthru
        _
    $region68: #{tpu_custom_call.1} parent=5 // pred_fallthru
      _
  $region6: #{tpu_custom_call.1} parent=0 // loop_footer
    %s21 = sadd.s32 1, %s17
  $region7: #{tpu_custom_call.1} parent=0 // loop_footer_branch
    %16 = sbr.rel target = $region3
  $region8: #{tpu_custom_call.1} parent=0 // loop_exit
    _

</llo_original>
